<compile_context>
chip_gen: v5e
topology: v5e:2x2
jax: 0.10.0
libtpu: 0.0.40
codegen_flags: <defaults>
</compile_context>

<pallas_src>
import numpy as np
import jax
import jax.numpy as jnp
from jax import lax
from jax.experimental import pallas as pl
from jax.experimental.pallas import tpu as pltpu


def _kde_kernel(xa_ref, ta_ref, scale_ref, o_ref, acc_ref):
    """One (test-tile, train-tile) grid step.

    xa_ref:    (Da_pad, TM) augmented test tile      (VMEM)
    ta_ref:    (TN, Da_pad) augmented train tile     (VMEM)
    scale_ref: (1,)         constant / N             (SMEM)
    o_ref:     (1, TM)      densities for this test tile (lane-dense)
    acc_ref:   (1, TM)      f32 accumulator (VMEM scratch, resident across N tiles)
    """
    k = pl.program_id(1)

    @pl.when(k == 0)
    def _():
        acc_ref[...] = jnp.zeros_like(acc_ref)

    # arg[j, i] = -0.5 * (x_i - t_j)^T H^{-1} (x_i - t_j)   -- one MXU matmul.
    # precision=HIGHEST: protect the exp argument from bf16 rounding (MXU is idle,
    # K = Da_pad = 8, so the extra passes are free).
    arg = jnp.dot(
        ta_ref[...], xa_ref[...],
        preferred_element_type=jnp.float32,
        precision=lax.Precision.HIGHEST,
    )
    arg = jnp.minimum(arg, 0.0)  # mathematically <= 0; guard rounding (free VALU slot)
    # NOTE(v5e): if the bundle shows a materialized (TN, TM) exp buffer saturating the
    # single vst slot, replace the sum with a ones-row matmul; neutral on v6e/v7x.
    acc_ref[...] += jnp.sum(jnp.exp(arg), axis=0, keepdims=True)  # (1, TM)

    @pl.when(k == pl.num_programs(1) - 1)
    def _():
        o_ref[...] = acc_ref[...] * scale_ref[0]


def _round_up(a, b):
    return ((a + b - 1) // b) * b


def kde_forward(test_Xs, train_Xs, bandwidth, *, tile_m=512, tile_n=4096):
    """Pallas KDE forward.  test_Xs: (M, D), train_Xs: (N, D), bandwidth: (D, D)."""
    assert tile_m % 128 == 0, "tile_m must be a multiple of 128 (lane width)"
    assert tile_n % 8 == 0, "tile_n must be a multiple of 8 (sublane width)"

    test_Xs = jnp.asarray(test_Xs, jnp.float32)
    train_Xs = jnp.asarray(train_Xs, jnp.float32)
    bandwidth = jnp.asarray(bandwidth, jnp.float32)

    M, D = test_Xs.shape
    N, _ = train_Xs.shape

    # --- tile selection -------------------------------------------------------
    # Keep >=2 tiles along the "parallel" M axis so v7x's 2 TensorCores both work
    # (harmless on v5e/v6e: one extra cheap grid step at most).
    tile_m = max(128, min(tile_m, _round_up(pl.cdiv(M, 2), 128)))
    # Don't tile the train axis past the (padded) train size.
    tile_n = max(8, min(tile_n, _round_up(N, 8)))

    hinv = jnp.linalg.inv(bandwidth)
    det = jnp.linalg.det(bandwidth)
    # Mirrors PyTorch precedence exactly: (2*pi)**(-D/2) * (det(H)**(-1) / 2)
    constant = (2.0 * np.pi) ** (-D / 2.0) * (det ** (-1.0) / 2.0)
    scale = jnp.reshape(constant / N, (1,)).astype(jnp.float32)  # const * mean folded

    # Center by the train mean (x - t is shift invariant): avoids catastrophic
    # cancellation in the expanded quadratic form for data with a large offset.
    mu = jnp.mean(train_Xs, axis=0, keepdims=True)
    x = test_Xs - mu
    t = train_Xs - mu

    # Bilinear matrix for the exp argument with -0.5 folded in (symmetric).
    B = -0.5 * (hinv + hinv.T)

    prec = lax.Precision.HIGHEST
    tB = jnp.dot(t, B, precision=prec)                      # (N, D)
    tbt = 0.5 * jnp.sum(tB * t, axis=-1, keepdims=True)     # (N, 1)
    xB = jnp.dot(x, B, precision=prec)                      # (M, D)
    xbx = 0.5 * jnp.sum(xB * x, axis=-1, keepdims=True)     # (M, 1)

    # Augmented operands: one (TN, Da_pad) @ (Da_pad, TM) matmul yields the exp arg.
    taug = jnp.concatenate([-tB, tbt, jnp.ones((N, 1), jnp.float32)], axis=1)  # (N, D+2)
    xaug = jnp.concatenate([x, jnp.ones((M, 1), jnp.float32), xbx], axis=1)    # (M, D+2)

    Da = D + 2
    Da_pad = max(8, _round_up(Da, 8))        # sublane-aligned contraction dim

    num_m = pl.cdiv(M, tile_m)
    num_k = pl.cdiv(N, tile_n)
    M_pad = num_m * tile_m
    N_pad = num_k * tile_n

    # Padding: padded train rows get a -1e9 bias via the tbt slot (times the test
    # ones-column), padded test lanes get a -1e9 bias via the xbx slot (times the
    # train ones-column) -> their exp underflows to exactly 0.
    MASK = jnp.float32(-1e9)
    taug_p = (jnp.zeros((N_pad, Da_pad), jnp.float32)
              .at[:N, :Da].set(taug)
              .at[N:, D].set(MASK))
    xaug_p = (jnp.zeros((M_pad, Da_pad), jnp.float32)
              .at[:M, :Da].set(xaug)
              .at[M:, D + 1].set(MASK))
    xaug_pT = xaug_p.T                                       # (Da_pad, M_pad)

    # --- explicit VMEM budget (don't rely on per-generation scoped defaults) ---
    # (tile_n, tile_m) f32 matmul result + exp temp, double-buffered taug block
    # (rows pad to 128 lanes in VMEM), double-buffered xaug/out, plus slack.
    itm_bytes = 2 * tile_n * tile_m * 4
    taug_bytes = 2 * tile_n * 128 * 4
    xaug_bytes = 2 * Da_pad * tile_m * 4 + 2 * 8 * tile_m * 4
    vmem_limit = int(1.5 * (itm_bytes + taug_bytes + xaug_bytes)) + (4 << 20)
    vmem_limit = max(16 << 20, min(vmem_limit, 48 << 20))    # headroom on v7x's 64 MiB

    out = pl.pallas_call(
        _kde_kernel,
        out_shape=jax.ShapeDtypeStruct((1, M_pad), jnp.float32),
        grid_spec=pltpu.PrefetchScalarGridSpec(
            num_scalar_prefetch=0,
            grid=(num_m, num_k),                     # reduction (train) axis last
            in_specs=[
                pl.BlockSpec((Da_pad, tile_m), lambda i, k: (0, i)),   # augmented test^T
                pl.BlockSpec((tile_n, Da_pad), lambda i, k: (k, 0)),   # augmented train
                pl.BlockSpec(memory_space=pltpu.SMEM),                 # constant / N
            ],
            out_specs=pl.BlockSpec((1, tile_m), lambda i, k: (0, i)),  # lane-dense
            scratch_shapes=[pltpu.VMEM((1, tile_m), jnp.float32)],
        ),
        compiler_params=pltpu.CompilerParams(
            dimension_semantics=("parallel", "arbitrary"),
            vmem_limit_bytes=vmem_limit,
        ),
    )(xaug_pT, taug_p, scale)

    return out[0, :M]


def make_bandwidth(train_Xs, dims):
    """Default bandwidth from KernelDensityEstimator.__init__ (torch .std(0) uses ddof=1)."""
    n = train_Xs.shape[0]
    std = jnp.std(train_Xs, axis=0, ddof=1)
    sqrt_h = (4.0 / (dims + 2.0)) ** (1.0 / (dims + 4.0)) * n ** (-1.0 / (dims + 4.0)) * std
    return (sqrt_h ** 2) * jnp.eye(dims, dtype=jnp.float32)


def kde_reference(test_Xs, train_Xs, bandwidth):
    """Plain-JAX reference mirroring the PyTorch forward (for verification)."""
    dims = bandwidth.shape[0]
    hinv = jnp.linalg.inv(bandwidth)
    det = jnp.linalg.det(bandwidth)
    constant = (2.0 * np.pi) ** (-dims / 2.0) * (det ** (-1.0) / 2.0)
    diffs = test_Xs[:, None, :] - train_Xs[None, :, :]                 # (M, N, D)
    hd = jnp.einsum("mnd,de->mne", diffs, hinv, precision=lax.Precision.HIGHEST)
    quad = jnp.sum(hd * diffs, axis=-1)                                # (M, N)
    return (constant * jnp.exp(-0.5 * quad)).mean(axis=1)              # (M,)


if __name__ == "__main__":
    key = jax.random.PRNGKey(0)
    k_train, k_test = jax.random.split(key)

    N, M, D = 500, 200, 4                     # train points, test points, feature dims
    train_Xs = 1.5 + jax.random.normal(k_train, (N, D), dtype=jnp.float32)
    test_Xs = 1.5 + jax.random.normal(k_test, (M, D), dtype=jnp.float32)

    bandwidth = make_bandwidth(train_Xs, D)
    ref = kde_reference(test_Xs, train_Xs, bandwidth)

    # 1) Small explicit tiles: exercises padding and a multi-tile (2 x 2) grid.
    dens_small = jax.block_until_ready(
        kde_forward(test_Xs, train_Xs, bandwidth, tile_m=128, tile_n=256))
    np.testing.assert_allclose(np.asarray(dens_small), np.asarray(ref),
                               rtol=5e-4, atol=1e-6)

    # 2) Default (large, auto-clamped) tiles: the production path.
    dens = jax.block_until_ready(kde_forward(test_Xs, train_Xs, bandwidth))
    np.testing.assert_allclose(np.asarray(dens), np.asarray(ref),
                               rtol=5e-4, atol=1e-6)

    print("KERNEL_OK")
</pallas_src>

<mosaic_0001>
module attributes {stable_mosaic.version = 11 : i64} {
  func.func @_kde_kernel(%arg0: i32, %arg1: i32, %arg2: memref<8x128xf32, #tpu.memory_space<vmem>>, %arg3: memref<256x8xf32, #tpu.memory_space<vmem>>, %arg4: memref<1xf32, #tpu.memory_space<smem>>, %arg5: memref<1x128xf32, #tpu.memory_space<vmem>>, %arg6: memref<1x128xf32, #tpu.memory_space<vmem>>) attributes {dimension_semantics = [#tpu.dimension_semantics<parallel>, #tpu.dimension_semantics<arbitrary>], iteration_bounds = array<i64: 2, 2>, scalar_prefetch = 0 : i64, scratch_operands = 1 : i64, tpu.core_type = #tpu.core_type<tc>, window_params = [{transform_indices = @transform_0, window_bounds = array<i64: 8, 128>}, {transform_indices = @transform_1, window_bounds = array<i64: 256, 8>}, {transform_indices = @transform_2, window_bounds = array<i64: 1>}, {transform_indices = @transform_3, window_bounds = array<i64: 1, 128>}]} {
    %c0_i32 = arith.constant 0 : i32
    %0 = arith.cmpi eq, %arg1, %c0_i32 : i32
    %1 = arith.extui %0 : i1 to i32
    %c0_i32_0 = arith.constant 0 : i32
    %2 = arith.cmpi ne, %1, %c0_i32_0 : i32
    scf.if %2 {
      %cst_11 = arith.constant 0.000000e+00 : f32
      %17 = vector.broadcast %cst_11 : f32 to vector<1x128xf32>
      %c0_12 = arith.constant 0 : index
      %c0_13 = arith.constant 0 : index
      %18 = vector.load %arg6[%c0_12, %c0_13] : memref<1x128xf32, #tpu.memory_space<vmem>>, vector<1x128xf32>
      tpu.vector_store %arg6[%c0_12, %c0_13], %17 {strides = array<i32>} : memref<1x128xf32, #tpu.memory_space<vmem>>, vector<1x128xf32>,
    } else {
    }
    %c0 = arith.constant 0 : index
    %c0_1 = arith.constant 0 : index
    %3 = vector.load %arg3[%c0, %c0_1] : memref<256x8xf32, #tpu.memory_space<vmem>>, vector<256x8xf32>
    %c0_2 = arith.constant 0 : index
    %c0_3 = arith.constant 0 : index
    %4 = vector.load %arg2[%c0_2, %c0_3] : memref<8x128xf32, #tpu.memory_space<vmem>>, vector<8x128xf32>
    %cst = arith.constant dense<0.000000e+00> : vector<256x128xf32>
    %5 = tpu.matmul %3, %4, %cst {dimension_numbers = #tpu.dot_dimension_numbers<[1], [0], [0], [1], [0, 0, 1, 1], [], []>, precision = #tpu.contract_precision<fp32>} : vector<256x8xf32>, vector<8x128xf32>, vector<256x128xf32> -> vector<256x128xf32>
    %cst_4 = arith.constant 0.000000e+00 : f32
    %6 = vector.broadcast %cst_4 : f32 to vector<256x128xf32>
    %7 = arith.minimumf %5, %6 : vector<256x128xf32>
    %c0_5 = arith.constant 0 : index
    %c0_6 = arith.constant 0 : index
    %8 = vector.load %arg6[%c0_5, %c0_6] : memref<1x128xf32, #tpu.memory_space<vmem>>, vector<1x128xf32>
    %9 = math.exp %7 : vector<256x128xf32>
    %cst_7 = arith.constant dense<0.000000e+00> : vector<128xf32>
    %10 = vector.multi_reduction <add>, %9, %cst_7 [0] : vector<256x128xf32> to vector<128xf32>
    %11 = vector.shape_cast %10 : vector<128xf32> to vector<1x128xf32>
    %12 = arith.addf %8, %11 : vector<1x128xf32>
    %c0_8 = arith.constant 0 : index
    %c0_9 = arith.constant 0 : index
    %13 = vector.load %arg6[%c0_8, %c0_9] : memref<1x128xf32, #tpu.memory_space<vmem>>, vector<1x128xf32>
    tpu.vector_store %arg6[%c0_8, %c0_9], %12 {strides = array<i32>} : memref<1x128xf32, #tpu.memory_space<vmem>>, vector<1x128xf32>,
    %c1_i32 = arith.constant 1 : i32
    %14 = arith.cmpi eq, %arg1, %c1_i32 : i32
    %15 = arith.extui %14 : i1 to i32
    %c0_i32_10 = arith.constant 0 : i32
    %16 = arith.cmpi ne, %15, %c0_i32_10 : i32
    scf.if %16 {
      %c0_11 = arith.constant 0 : index
      %c0_12 = arith.constant 0 : index
      %17 = vector.load %arg6[%c0_11, %c0_12] : memref<1x128xf32, #tpu.memory_space<vmem>>, vector<1x128xf32>
      %c0_13 = arith.constant 0 : index
      %18 = memref.load %arg4[%c0_13] : memref<1xf32, #tpu.memory_space<smem>>
      %19 = vector.broadcast %18 : f32 to vector<1x128xf32>
      %20 = arith.mulf %17, %19 : vector<1x128xf32>
      %c0_14 = arith.constant 0 : index
      %c0_15 = arith.constant 0 : index
      %21 = vector.load %arg5[%c0_14, %c0_15] : memref<1x128xf32, #tpu.memory_space<vmem>>, vector<1x128xf32>
      tpu.vector_store %arg5[%c0_14, %c0_15], %20 {strides = array<i32>} : memref<1x128xf32, #tpu.memory_space<vmem>>, vector<1x128xf32>,
    } else {
    }
    return
  }
  func.func @transform_0(%arg0: i32, %arg1: i32) -> (i32, i32) {
    %c0_i32 = arith.constant 0 : i32
    %c0_i32_0 = arith.constant 0 : i32
    return %c0_i32, %arg0 : i32, i32
  }
  func.func @transform_1(%arg0: i32, %arg1: i32) -> (i32, i32) {
    %c0_i32 = arith.constant 0 : i32
    %c0_i32_0 = arith.constant 0 : i32
    return %arg1, %c0_i32 : i32, i32
  }
  func.func @transform_2(%arg0: i32, %arg1: i32) -> i32 {
    %c0_i32 = arith.constant 0 : i32
    %c0_i32_0 = arith.constant 0 : i32
    return %c0_i32 : i32
  }
  func.func @transform_3(%arg0: i32, %arg1: i32) -> (i32, i32) {
    %c0_i32 = arith.constant 0 : i32
    %c0_i32_0 = arith.constant 0 : i32
    return %c0_i32, %arg0 : i32, i32
  }
}

</mosaic_0001>

<llo_original>
// kernel: tpu_custom_call.1
$region0: #{tpu_custom_call.1}
  #allocation0 [shape = 'u32[]', space=smem, size = 0x4, offset = 0x4, fixed_abs, tag = 'smem constant byte address 0x4 - core index']
  #allocation1 [shape = 'u32[72,128]{1,0:T(1,128)}', space=vmem, size = 0x9000, scoped, tag = 'internal scratch']
  #allocation2 [shape = 'f32[1,128]{1,0:T(1,128)}', space=vmem, size = 0x200, scoped, tag = 'scratch operand']
  #allocation3 [shape = 'f32[1]{0:T(128)S(6)}', space=smem, size = 0x200, scoped, tag = 'scoped memory for tpu_custom_call.1']
  %s0 = inlined_call_operand.vmem [shape: f32[8,256], index: 0, kind: input, shape index: {}]
  %s1 = inlined_call_operand.vmem [shape: f32[512,8], index: 1, kind: input, shape index: {}]
  %s2 = inlined_call_operand.<no memory space> [shape: f32[1], index: 2, kind: input, shape index: {}]
  %s3 = inlined_call_operand.hbm [shape: f32[1,256], index: 3, kind: output, shape index: {}]
  %s4 = sld [smem:[#allocation0]]
  $region53: #{tpu_custom_call.1} parent=0
    _
  %s6 = ssub.s32 1, %s4
  %s7 = scalar_select 0, %s6, %s4
  %8 = sst [smem:[#allocation3]] %s2
  $region1: #{tpu_custom_call.1} parent=0
    #allocation4 [shape = 'u8[1024]{0}', space=vmem, size = 0x400, scoped, tag = 'output window, operand 0']
    #allocation5 [shape = 's32[2]{0}', space=sflag, size = 0x8, scoped, tag = 'scoped memory for tpu_custom_call.1']
    %9 = vsyncpa [#allocation5], 0
    %s10 = scalar_lea.sflag [#allocation5], 1
    %11 = vsyncpa %s10, 0
    loop: start=0, step=1, limit=6
    $region2: #{tpu_custom_call.1} parent=1 // loop_pre_header
      _
    $region3: #{tpu_custom_call.1} parent=1 // loop_header
      %s13 = sphi 0, %s17
      %p14 = scmp.ge.s32.totalorder %s13, 6
      %s20 = sphi 0, %s32
      %s21 = sphi 0, %s28
      %s22 = sphi 0, %s20
      %s23 = sphi 0, %s21
      %s24 = sphi 0, %s22
      %s25 = sphi 0, %s23
      %s35 = sphi 0, %s37
      %s38 = sphi 0, %s35
      %s39 = sphi 0, %s38
      %s55 = sphi 0, %s39
      %s61 = sphi 0, %s63
      %s64 = sphi 0, %s61
      %s65 = sphi 0, %s64
      %s81 = sphi 0, %s65
      %s85 = sphi 0, %s85
      %s87 = sphi 0, %s85
      %s88 = sphi 0, %s87
      %s102 = sphi 0, %s88
      %s108 = sphi 0, %s110
      %s111 = sphi 0, %s108
      %s112 = sphi 0, %s111
      %s128 = sphi 0, %s112
    $region4: #{tpu_custom_call.1} parent=1 // loop_header_branch
      %16 = sbr.rel (%p14) target = $region8
    $region5: #{tpu_custom_call.1} parent=1 // loop_body
      %s18 = ssub.s32 %s13, 1
      %s19 = ssub.s32 %s13, 2
      %s26 = sadd.s32 1, %s21
      %p27 = scmp.ge.s32.totalorder %s26, 2
      %s28 = scalar_select %p27, 0, %s26
      %s29 = sadd.s32 1, %s20
      %s30 = scalar_select %p27, %s29, %s20
      %p31 = scmp.ge.s32.totalorder %s30, 2
      %s32 = scalar_select %p31, 0, %s30
      %s33 = ssub.s32 %s20, %s32
      %p34 = scmp.eq.s32.totalorder %s33, 0
      %s36 = sadd.s32 %s35, 1
      %s37 = scalar_select %p34, %s35, %s36
      %p40 = pneg %p34
      %p41 = scmp.eq.s32.totalorder %s13, 3
      %p42 = por %p40, %p41
      %p43 = scmp.ne.s32.totalorder %s35, %s38
      %p44 = scmp.eq.s32.totalorder %s13, 0
      %p45 = por %p43, %p44
      %p46 = scmp.ne.s32.totalorder %s35, %s38
      %p47 = scmp.eq.s32.totalorder %s18, 3
      %p48 = por %p46, %p47
      %p49 = scmp.ne.s32.totalorder %s38, %s39
      %p50 = scmp.eq.s32.totalorder %s18, 0
      %p51 = por %p49, %p50
      %p52 = scmp.ne.s32.totalorder %s38, %s39
      %p53 = scmp.eq.s32.totalorder %s19, 3
      %p54 = por %p52, %p53
      %p56 = scmp.ne.s32.totalorder %s39, %s55
      %p57 = scmp.eq.s32.totalorder %s19, 0
      %p58 = por %p56, %p57
      %s59 = ssub.s32 %s21, %s28
      %p60 = scmp.eq.s32.totalorder %s59, 0
      %s62 = sadd.s32 %s61, 1
      %s63 = scalar_select %p60, %s61, %s62
      %p66 = pneg %p60
      %p67 = scmp.eq.s32.totalorder %s13, 3
      %p68 = por %p66, %p67
      %p69 = scmp.ne.s32.totalorder %s61, %s64
      %p70 = scmp.eq.s32.totalorder %s13, 0
      %p71 = por %p69, %p70
      %p72 = scmp.ne.s32.totalorder %s61, %s64
      %p73 = scmp.eq.s32.totalorder %s18, 3
      %p74 = por %p72, %p73
      %p75 = scmp.ne.s32.totalorder %s64, %s65
      %p76 = scmp.eq.s32.totalorder %s18, 0
      %p77 = por %p75, %p76
      %p78 = scmp.ne.s32.totalorder %s64, %s65
      %p79 = scmp.eq.s32.totalorder %s19, 3
      %p80 = por %p78, %p79
      %p82 = scmp.ne.s32.totalorder %s65, %s81
      %p83 = scmp.eq.s32.totalorder %s19, 0
      %p84 = por %p82, %p83
      %s86 = sadd.s32 %s85, 1
      %p89 = scmp.eq.s32.totalorder %s13, 3
      %p90 = scmp.ne.s32.totalorder %s85, %s87
      %p91 = scmp.eq.s32.totalorder %s13, 0
      %p92 = por %p90, %p91
      %p93 = scmp.ne.s32.totalorder %s85, %s87
      %p94 = scmp.eq.s32.totalorder %s18, 3
      %p95 = por %p93, %p94
      %p96 = scmp.ne.s32.totalorder %s87, %s88
      %p97 = scmp.eq.s32.totalorder %s18, 0
      %p98 = por %p96, %p97
      %p99 = scmp.ne.s32.totalorder %s87, %s88
      %p100 = scmp.eq.s32.totalorder %s19, 3
      %p101 = por %p99, %p100
      %p103 = scmp.ne.s32.totalorder %s88, %s102
      %p104 = scmp.eq.s32.totalorder %s19, 0
      %p105 = por %p103, %p104
      %s106 = ssub.s32 %s20, %s32
      %p107 = scmp.eq.s32.totalorder %s106, 0
      %s109 = sadd.s32 %s108, 1
      %s110 = scalar_select %p107, %s108, %s109
      %p113 = pneg %p107
      %p114 = scmp.eq.s32.totalorder %s13, 3
      %p115 = por %p113, %p114
      %p116 = scmp.ne.s32.totalorder %s108, %s111
      %p117 = scmp.eq.s32.totalorder %s13, 0
      %p118 = por %p116, %p117
      %p119 = scmp.ne.s32.totalorder %s108, %s111
      %p120 = scmp.eq.s32.totalorder %s18, 3
      %p121 = por %p119, %p120
      %p122 = scmp.ne.s32.totalorder %s111, %s112
      %p123 = scmp.eq.s32.totalorder %s18, 0
      %p124 = por %p122, %p123
      %p125 = scmp.ne.s32.totalorder %s111, %s112
      %p126 = scmp.eq.s32.totalorder %s19, 3
      %p127 = por %p125, %p126
      %p129 = scmp.ne.s32.totalorder %s112, %s128
      %p130 = scmp.eq.s32.totalorder %s19, 0
      %p131 = por %p129, %p130
      %p132 = scmp.le.s32.totalorder 1, %s13
      %p133 = scmp.lt.s32.totalorder %s13, 5
      %p134 = pnand %p132, %p133
      %p135 = pneg %p134
      // Predicated region
      $region9: #{tpu_custom_call.1} parent=5 // pred_check
        _
      $region10: #{tpu_custom_call.1} parent=5 // pred_check_branch
        %137 = sbr.rel (%p134) target = $region12
      $region11: #{tpu_custom_call.1} parent=5 // pred_region
        %s138 = ssub.s32 %s13, 1
        // Predicated region
        $region13: #{tpu_custom_call.1} parent=11 // pred_check
          %p139 = pneg %p98
        $region14: #{tpu_custom_call.1} parent=11 // pred_check_branch
          %141 = sbr.rel (%p139) target = $region16
        $region15: #{tpu_custom_call.1} parent=11 // pred_region
          _
        $region16: #{tpu_custom_call.1} parent=11 // pred_fallthru
          _
      $region12: #{tpu_custom_call.1} parent=5 // pred_fallthru
        _
      %p142 = scmp.lt.s32.totalorder %s13, 4
      // Predicated region
      $region17: #{tpu_custom_call.1} parent=5 // pred_check
        %p143 = pneg %p142
      $region18: #{tpu_custom_call.1} parent=5 // pred_check_branch
        %145 = sbr.rel (%p143) target = $region20
      $region19: #{tpu_custom_call.1} parent=5 // pred_region
        // Predicated region
        $region21: #{tpu_custom_call.1} parent=19 // pred_check
          %p146 = pneg %p45
        $region22: #{tpu_custom_call.1} parent=19 // pred_check_branch
          %148 = sbr.rel (%p146) target = $region24
        $region23: #{tpu_custom_call.1} parent=19 // pred_region
          %p149 = scmp.lt.s32.totalorder %s20, 1
          %s150 = scalar_select %p149, %s20, 1
          %s151 = smul.addr %s150, 8
          %s152 = scalar_lea.vmem %s0, %s151
        $region24: #{tpu_custom_call.1} parent=19 // pred_fallthru
          _
        // Predicated region
        $region25: #{tpu_custom_call.1} parent=19 // pred_check
          %p153 = pneg %p71
        $region26: #{tpu_custom_call.1} parent=19 // pred_check_branch
          %155 = sbr.rel (%p153) target = $region28
        $region27: #{tpu_custom_call.1} parent=19 // pred_region
          %s156 = smul.u32 32, %s21
          %p157 = scmp.lt.s32.totalorder %s156, 63
          %s158 = scalar_select %p157, %s156, 63
          %s159 = smul.addr %s158, 8
          %s160 = scalar_lea.vmem %s1, %s159
          %s161 = smul.u32 32, %s21
        $region28: #{tpu_custom_call.1} parent=19 // pred_fallthru
          _
      $region20: #{tpu_custom_call.1} parent=5 // pred_fallthru
        _
      %p162 = scmp.le.s32.totalorder 1, %s13
      %p163 = scmp.lt.s32.totalorder %s13, 5
      %p164 = pnand %p162, %p163
      %p165 = pneg %p164
      // Predicated region
      $region29: #{tpu_custom_call.1} parent=5 // pred_check
        _
      $region30: #{tpu_custom_call.1} parent=5 // pred_check_branch
        %167 = sbr.rel (%p164) target = $region32
      $region31: #{tpu_custom_call.1} parent=5 // pred_region
        %s168 = ssub.s32 %s13, 1
        %p169 = scmp.lt.s32.totalorder %s22, 1
        %s170 = scalar_select %p169, %s22, 1
        %s171 = smul.addr %s170, 8
        %s172 = scalar_lea.vmem %s0, %s171
        %p173 = pneg %p51
        %p174 = pneg %p48
        %s175 = smul.u32 32, %s23
        %p176 = scmp.lt.s32.totalorder %s175, 63
        %s177 = scalar_select %p176, %s175, 63
        %s178 = smul.addr %s177, 8
        %s179 = scalar_lea.vmem %s1, %s178
        %p180 = pneg %p77
        %p181 = pneg %p74
        %p182 = pneg %p98
        %p183 = pneg %p95
        %p184 = pneg %p124
        %p185 = pneg %p121
        %s186 = sand.u32 %s111, 1
        %s187 = scalar_lea.sflag [#allocation5], %s186
        %s188 = sand.u32 %s111, 1
        %s189 = scalar_lea.vmem [#allocation4], %s188
        %p190 = scmp.lt.s32.totalorder %s22, 1
        %s191 = scalar_select %p190, %s22, 1
        %s192 = smul.addr %s191, 8
        %s193 = scalar_lea.vmem %s0, %s192
        %s194 = smul.u32 32, %s23
        %p195 = scmp.lt.s32.totalorder %s194, 63
        %s196 = scalar_select %p195, %s194, 63
        %s197 = smul.addr %s196, 8
        %s198 = scalar_lea.vmem %s1, %s197
        %s199 = smul.u32 32, %s23
        %p200 = scmp.eq.s32.totalorder %s23, 0
        // Predicated region
        $region33: #{tpu_custom_call.1} parent=31 // pred_check
          %p201 = pneg %p200
        $region34: #{tpu_custom_call.1} parent=31 // pred_check_branch
          %203 = sbr.rel (%p201) target = $region36
        $region35: #{tpu_custom_call.1} parent=31 // pred_region
          %204 = vst [vmem:[#allocation2] sm:$0x1] 0.0
        $region36: #{tpu_custom_call.1} parent=31 // pred_fallthru
          _
        %v205 = vld [vmem:[%s198] sm:$0xff]
        %v206 = vld [vmem:[%s198 + $0x8] sm:$0xff]
        %v207 = vld [vmem:[%s198 + $0x10] sm:$0xff]
        %v208 = vld [vmem:[%s198 + $0x18] sm:$0xff]
        %v209 = vld [vmem:[%s198 + $0x20] sm:$0xff]
        %v210 = vld [vmem:[%s198 + $0x28] sm:$0xff]
        %v211 = vld [vmem:[%s198 + $0x30] sm:$0xff]
        %v212 = vld [vmem:[%s198 + $0x38] sm:$0xff]
        %v213 = vld [vmem:[%s198 + $0x40] sm:$0xff]
        %v214 = vld [vmem:[%s198 + $0x48] sm:$0xff]
        %v215 = vld [vmem:[%s198 + $0x50] sm:$0xff]
        %v216 = vld [vmem:[%s198 + $0x58] sm:$0xff]
        %v217 = vld [vmem:[%s198 + $0x60] sm:$0xff]
        %v218 = vld [vmem:[%s198 + $0x68] sm:$0xff]
        %v219 = vld [vmem:[%s198 + $0x70] sm:$0xff]
        %v220 = vld [vmem:[%s198 + $0x78] sm:$0xff]
        %v221 = vld [vmem:[%s198 + $0x80] sm:$0xff]
        %v222 = vld [vmem:[%s198 + $0x88] sm:$0xff]
        %v223 = vld [vmem:[%s198 + $0x90] sm:$0xff]
        %v224 = vld [vmem:[%s198 + $0x98] sm:$0xff]
        %v225 = vld [vmem:[%s198 + $0xa0] sm:$0xff]
        %v226 = vld [vmem:[%s198 + $0xa8] sm:$0xff]
        %v227 = vld [vmem:[%s198 + $0xb0] sm:$0xff]
        %v228 = vld [vmem:[%s198 + $0xb8] sm:$0xff]
        %v229 = vld [vmem:[%s198 + $0xc0] sm:$0xff]
        %v230 = vld [vmem:[%s198 + $0xc8] sm:$0xff]
        %v231 = vld [vmem:[%s198 + $0xd0] sm:$0xff]
        %v232 = vld [vmem:[%s198 + $0xd8] sm:$0xff]
        %v233 = vld [vmem:[%s198 + $0xe0] sm:$0xff]
        %v234 = vld [vmem:[%s198 + $0xe8] sm:$0xff]
        %v235 = vld [vmem:[%s198 + $0xf0] sm:$0xff]
        %v236 = vld [vmem:[%s198 + $0xf8] sm:$0xff]
        %v237 = vld [vmem:[%s193] sm:$0xff]
        %vm238 = vcmask 64512
        %v240 = vsel %vm238, %v205, 0
        %v243 = vsel %vm238, %v206, 0
        %v246 = vsel %vm238, %v207, 0
        %v249 = vsel %vm238, %v208, 0
        %v252 = vsel %vm238, %v209, 0
        %v255 = vsel %vm238, %v210, 0
        %v258 = vsel %vm238, %v211, 0
        %v261 = vsel %vm238, %v212, 0
        %v264 = vsel %vm238, %v213, 0
        %v267 = vsel %vm238, %v214, 0
        %v270 = vsel %vm238, %v215, 0
        %v273 = vsel %vm238, %v216, 0
        %v276 = vsel %vm238, %v217, 0
        %v279 = vsel %vm238, %v218, 0
        %v282 = vsel %vm238, %v219, 0
        %v285 = vsel %vm238, %v220, 0
        %v288 = vsel %vm238, %v221, 0
        %v291 = vsel %vm238, %v222, 0
        %v294 = vsel %vm238, %v223, 0
        %v297 = vsel %vm238, %v224, 0
        %v300 = vsel %vm238, %v225, 0
        %v303 = vsel %vm238, %v226, 0
        %v306 = vsel %vm238, %v227, 0
        %v309 = vsel %vm238, %v228, 0
        %v312 = vsel %vm238, %v229, 0
        %v315 = vsel %vm238, %v230, 0
        %v318 = vsel %vm238, %v231, 0
        %v321 = vsel %vm238, %v232, 0
        %v324 = vsel %vm238, %v233, 0
        %v327 = vsel %vm238, %v234, 0
        %v330 = vsel %vm238, %v235, 0
        %v333 = vsel %vm238, %v236, 0
        %335 = vmatpush.msra.mxu0 0.0
        %336 = vmatpush.msra.mxu0 0.0
        %337 = vmatpush.msra.mxu0 0.0
        %338 = vmatpush.msra.mxu0 0.0
        %339 = vmatpush.msra.mxu0 0.0
        %340 = vmatpush.msra.mxu0 0.0
        %341 = vmatpush.msra.mxu0 0.0
        %342 = vmatpush.msra.mxu0 0.0
        %343 = vmatpush.msra.mxu0 0.0
        %344 = vmatpush.msra.mxu0 0.0
        %345 = vmatpush.msra.mxu0 0.0
        %346 = vmatpush.msra.mxu0 0.0
        %347 = vmatpush.msra.mxu0 0.0
        %348 = vmatpush.msra.mxu0 0.0
        %349 = vmatpush.msra.mxu0 0.0
        %v350 = vand.u32 %v237, 4294901760
        %351 = vmatpush.msra.mxu0 %v350
        %v352 = vand.u32 %v240, 4294901760
        %v353 = vsub.f32 %v240, %v352
        %v354 = vand.u32 %v353, 4294901760
        %v355 = vsub.f32 %v353, %v354
        %v356 = vand.u32 %v355, 4294901760
        %357 = vmatmul.f32.gmra.mxu0 %v356
        %v358 = vpop.f32.mrf.mxu0
        %v359 = vadd.f32 0.0, %v358
        %v360 = vand.u32 %v243, 4294901760
        %v361 = vsub.f32 %v243, %v360
        %v362 = vand.u32 %v361, 4294901760
        %v363 = vsub.f32 %v361, %v362
        %v364 = vand.u32 %v363, 4294901760
        %365 = vmatmul.f32.gmra.mxu0 %v364
        %v366 = vpop.f32.mrf.mxu0
        %v367 = vadd.f32 0.0, %v366
        %v368 = vand.u32 %v246, 4294901760
        %v369 = vsub.f32 %v246, %v368
        %v370 = vand.u32 %v369, 4294901760
        %v371 = vsub.f32 %v369, %v370
        %v372 = vand.u32 %v371, 4294901760
        %373 = vmatmul.f32.gmra.mxu0 %v372
        %v374 = vpop.f32.mrf.mxu0
        %v375 = vadd.f32 0.0, %v374
        %v376 = vand.u32 %v249, 4294901760
        %v377 = vsub.f32 %v249, %v376
        %v378 = vand.u32 %v377, 4294901760
        %v379 = vsub.f32 %v377, %v378
        %v380 = vand.u32 %v379, 4294901760
        %381 = vmatmul.f32.gmra.mxu0 %v380
        %v382 = vpop.f32.mrf.mxu0
        %v383 = vadd.f32 0.0, %v382
        %v384 = vand.u32 %v252, 4294901760
        %v385 = vsub.f32 %v252, %v384
        %v386 = vand.u32 %v385, 4294901760
        %v387 = vsub.f32 %v385, %v386
        %v388 = vand.u32 %v387, 4294901760
        %389 = vmatmul.f32.gmra.mxu0 %v388
        %v390 = vpop.f32.mrf.mxu0
        %v391 = vadd.f32 0.0, %v390
        %v392 = vand.u32 %v255, 4294901760
        %v393 = vsub.f32 %v255, %v392
        %v394 = vand.u32 %v393, 4294901760
        %v395 = vsub.f32 %v393, %v394
        %v396 = vand.u32 %v395, 4294901760
        %397 = vmatmul.f32.gmra.mxu0 %v396
        %v398 = vpop.f32.mrf.mxu0
        %v399 = vadd.f32 0.0, %v398
        %v400 = vand.u32 %v258, 4294901760
        %v401 = vsub.f32 %v258, %v400
        %v402 = vand.u32 %v401, 4294901760
        %v403 = vsub.f32 %v401, %v402
        %v404 = vand.u32 %v403, 4294901760
        %405 = vmatmul.f32.gmra.mxu0 %v404
        %v406 = vpop.f32.mrf.mxu0
        %v407 = vadd.f32 0.0, %v406
        %v408 = vand.u32 %v261, 4294901760
        %v409 = vsub.f32 %v261, %v408
        %v410 = vand.u32 %v409, 4294901760
        %v411 = vsub.f32 %v409, %v410
        %v412 = vand.u32 %v411, 4294901760
        %413 = vmatmul.f32.gmra.mxu0 %v412
        %v414 = vpop.f32.mrf.mxu0
        %v415 = vadd.f32 0.0, %v414
        %v416 = vand.u32 %v264, 4294901760
        %v417 = vsub.f32 %v264, %v416
        %v418 = vand.u32 %v417, 4294901760
        %v419 = vsub.f32 %v417, %v418
        %v420 = vand.u32 %v419, 4294901760
        %421 = vmatmul.f32.gmra.mxu0 %v420
        %v422 = vpop.f32.mrf.mxu0
        %v423 = vadd.f32 0.0, %v422
        %v424 = vand.u32 %v267, 4294901760
        %v425 = vsub.f32 %v267, %v424
        %v426 = vand.u32 %v425, 4294901760
        %v427 = vsub.f32 %v425, %v426
        %v428 = vand.u32 %v427, 4294901760
        %429 = vmatmul.f32.gmra.mxu0 %v428
        %v430 = vpop.f32.mrf.mxu0
        %v431 = vadd.f32 0.0, %v430
        %v432 = vand.u32 %v270, 4294901760
        %v433 = vsub.f32 %v270, %v432
        %v434 = vand.u32 %v433, 4294901760
        %v435 = vsub.f32 %v433, %v434
        %v436 = vand.u32 %v435, 4294901760
        %437 = vmatmul.f32.gmra.mxu0 %v436
        %v438 = vpop.f32.mrf.mxu0
        %v439 = vadd.f32 0.0, %v438
        %v440 = vand.u32 %v273, 4294901760
        %v441 = vsub.f32 %v273, %v440
        %v442 = vand.u32 %v441, 4294901760
        %v443 = vsub.f32 %v441, %v442
        %v444 = vand.u32 %v443, 4294901760
        %445 = vmatmul.f32.gmra.mxu0 %v444
        %v446 = vpop.f32.mrf.mxu0
        %v447 = vadd.f32 0.0, %v446
        %v448 = vand.u32 %v276, 4294901760
        %v449 = vsub.f32 %v276, %v448
        %v450 = vand.u32 %v449, 4294901760
        %v451 = vsub.f32 %v449, %v450
        %v452 = vand.u32 %v451, 4294901760
        %453 = vmatmul.f32.gmra.mxu0 %v452
        %v454 = vpop.f32.mrf.mxu0
        %v455 = vadd.f32 0.0, %v454
        %v456 = vand.u32 %v279, 4294901760
        %v457 = vsub.f32 %v279, %v456
        %v458 = vand.u32 %v457, 4294901760
        %v459 = vsub.f32 %v457, %v458
        %v460 = vand.u32 %v459, 4294901760
        %461 = vmatmul.f32.gmra.mxu0 %v460
        %v462 = vpop.f32.mrf.mxu0
        %v463 = vadd.f32 0.0, %v462
        %v464 = vand.u32 %v282, 4294901760
        %v465 = vsub.f32 %v282, %v464
        %v466 = vand.u32 %v465, 4294901760
        %v467 = vsub.f32 %v465, %v466
        %v468 = vand.u32 %v467, 4294901760
        %469 = vmatmul.f32.gmra.mxu0 %v468
        %v470 = vpop.f32.mrf.mxu0
        %v471 = vadd.f32 0.0, %v470
        %v472 = vand.u32 %v285, 4294901760
        %v473 = vsub.f32 %v285, %v472
        %v474 = vand.u32 %v473, 4294901760
        %v475 = vsub.f32 %v473, %v474
        %v476 = vand.u32 %v475, 4294901760
        %477 = vmatmul.f32.gmra.mxu0 %v476
        %v478 = vpop.f32.mrf.mxu0
        %v479 = vadd.f32 0.0, %v478
        %v480 = vand.u32 %v288, 4294901760
        %v481 = vsub.f32 %v288, %v480
        %v482 = vand.u32 %v481, 4294901760
        %v483 = vsub.f32 %v481, %v482
        %v484 = vand.u32 %v483, 4294901760
        %485 = vmatmul.f32.gmra.mxu0 %v484
        %v486 = vpop.f32.mrf.mxu0
        %v487 = vadd.f32 0.0, %v486
        %v488 = vand.u32 %v291, 4294901760
        %v489 = vsub.f32 %v291, %v488
        %v490 = vand.u32 %v489, 4294901760
        %v491 = vsub.f32 %v489, %v490
        %v492 = vand.u32 %v491, 4294901760
        %493 = vmatmul.f32.gmra.mxu0 %v492
        %v494 = vpop.f32.mrf.mxu0
        %v495 = vadd.f32 0.0, %v494
        %v496 = vand.u32 %v294, 4294901760
        %v497 = vsub.f32 %v294, %v496
        %v498 = vand.u32 %v497, 4294901760
        %v499 = vsub.f32 %v497, %v498
        %v500 = vand.u32 %v499, 4294901760
        %501 = vmatmul.f32.gmra.mxu0 %v500
        %v502 = vpop.f32.mrf.mxu0
        %v503 = vadd.f32 0.0, %v502
        %v504 = vand.u32 %v297, 4294901760
        %v505 = vsub.f32 %v297, %v504
        %v506 = vand.u32 %v505, 4294901760
        %v507 = vsub.f32 %v505, %v506
        %v508 = vand.u32 %v507, 4294901760
        %509 = vmatmul.f32.gmra.mxu0 %v508
        %v510 = vpop.f32.mrf.mxu0
        %v511 = vadd.f32 0.0, %v510
        %v512 = vand.u32 %v300, 4294901760
        %v513 = vsub.f32 %v300, %v512
        %v514 = vand.u32 %v513, 4294901760
        %v515 = vsub.f32 %v513, %v514
        %v516 = vand.u32 %v515, 4294901760
        %517 = vmatmul.f32.gmra.mxu0 %v516
        %v518 = vpop.f32.mrf.mxu0
        %v519 = vadd.f32 0.0, %v518
        %v520 = vand.u32 %v303, 4294901760
        %v521 = vsub.f32 %v303, %v520
        %v522 = vand.u32 %v521, 4294901760
        %v523 = vsub.f32 %v521, %v522
        %v524 = vand.u32 %v523, 4294901760
        %525 = vmatmul.f32.gmra.mxu0 %v524
        %v526 = vpop.f32.mrf.mxu0
        %v527 = vadd.f32 0.0, %v526
        %v528 = vand.u32 %v306, 4294901760
        %v529 = vsub.f32 %v306, %v528
        %v530 = vand.u32 %v529, 4294901760
        %v531 = vsub.f32 %v529, %v530
        %v532 = vand.u32 %v531, 4294901760
        %533 = vmatmul.f32.gmra.mxu0 %v532
        %v534 = vpop.f32.mrf.mxu0
        %v535 = vadd.f32 0.0, %v534
        %v536 = vand.u32 %v309, 4294901760
        %v537 = vsub.f32 %v309, %v536
        %v538 = vand.u32 %v537, 4294901760
        %v539 = vsub.f32 %v537, %v538
        %v540 = vand.u32 %v539, 4294901760
        %541 = vmatmul.f32.gmra.mxu0 %v540
        %v542 = vpop.f32.mrf.mxu0
        %v543 = vadd.f32 0.0, %v542
        %v544 = vand.u32 %v312, 4294901760
        %v545 = vsub.f32 %v312, %v544
        %v546 = vand.u32 %v545, 4294901760
        %v547 = vsub.f32 %v545, %v546
        %v548 = vand.u32 %v547, 4294901760
        %549 = vmatmul.f32.gmra.mxu0 %v548
        %v550 = vpop.f32.mrf.mxu0
        %v551 = vadd.f32 0.0, %v550
        %v552 = vand.u32 %v315, 4294901760
        %v553 = vsub.f32 %v315, %v552
        %v554 = vand.u32 %v553, 4294901760
        %v555 = vsub.f32 %v553, %v554
        %v556 = vand.u32 %v555, 4294901760
        %557 = vmatmul.f32.gmra.mxu0 %v556
        %v558 = vpop.f32.mrf.mxu0
        %v559 = vadd.f32 0.0, %v558
        %v560 = vand.u32 %v318, 4294901760
        %v561 = vsub.f32 %v318, %v560
        %v562 = vand.u32 %v561, 4294901760
        %v563 = vsub.f32 %v561, %v562
        %v564 = vand.u32 %v563, 4294901760
        %565 = vmatmul.f32.gmra.mxu0 %v564
        %v566 = vpop.f32.mrf.mxu0
        %v567 = vadd.f32 0.0, %v566
        %v568 = vand.u32 %v321, 4294901760
        %v569 = vsub.f32 %v321, %v568
        %v570 = vand.u32 %v569, 4294901760
        %v571 = vsub.f32 %v569, %v570
        %v572 = vand.u32 %v571, 4294901760
        %573 = vmatmul.f32.gmra.mxu0 %v572
        %v574 = vpop.f32.mrf.mxu0
        %v575 = vadd.f32 0.0, %v574
        %v576 = vand.u32 %v324, 4294901760
        %v577 = vsub.f32 %v324, %v576
        %v578 = vand.u32 %v577, 4294901760
        %v579 = vsub.f32 %v577, %v578
        %v580 = vand.u32 %v579, 4294901760
        %581 = vmatmul.f32.gmra.mxu0 %v580
        %v582 = vpop.f32.mrf.mxu0
        %v583 = vadd.f32 0.0, %v582
        %v584 = vand.u32 %v327, 4294901760
        %v585 = vsub.f32 %v327, %v584
        %v586 = vand.u32 %v585, 4294901760
        %v587 = vsub.f32 %v585, %v586
        %v588 = vand.u32 %v587, 4294901760
        %589 = vmatmul.f32.gmra.mxu0 %v588
        %v590 = vpop.f32.mrf.mxu0
        %v591 = vadd.f32 0.0, %v590
        %v592 = vand.u32 %v330, 4294901760
        %v593 = vsub.f32 %v330, %v592
        %v594 = vand.u32 %v593, 4294901760
        %v595 = vsub.f32 %v593, %v594
        %v596 = vand.u32 %v595, 4294901760
        %597 = vmatmul.f32.gmra.mxu0 %v596
        %v598 = vpop.f32.mrf.mxu0
        %v599 = vadd.f32 0.0, %v598
        %v600 = vand.u32 %v333, 4294901760
        %v601 = vsub.f32 %v333, %v600
        %v602 = vand.u32 %v601, 4294901760
        %v603 = vsub.f32 %v601, %v602
        %v604 = vand.u32 %v603, 4294901760
        %605 = vmatmul.f32.gmra.mxu0 %v604
        %v606 = vpop.f32.mrf.mxu0
        %v607 = vadd.f32 0.0, %v606
        %608 = vdwg.mxu0
        %609 = vmatpush.msra.mxu0 0.0
        %610 = vmatpush.msra.mxu0 0.0
        %611 = vmatpush.msra.mxu0 0.0
        %612 = vmatpush.msra.mxu0 0.0
        %613 = vmatpush.msra.mxu0 0.0
        %614 = vmatpush.msra.mxu0 0.0
        %615 = vmatpush.msra.mxu0 0.0
        %616 = vmatpush.msra.mxu0 0.0
        %617 = vmatpush.msra.mxu0 0.0
        %618 = vmatpush.msra.mxu0 0.0
        %619 = vmatpush.msra.mxu0 0.0
        %620 = vmatpush.msra.mxu0 0.0
        %621 = vmatpush.msra.mxu0 0.0
        %622 = vmatpush.msra.mxu0 0.0
        %623 = vmatpush.msra.mxu0 0.0
        %v624 = vand.u32 %v237, 4294901760
        %v625 = vsub.f32 %v237, %v624
        %v626 = vand.u32 %v625, 4294901760
        %v627 = vsub.f32 %v625, %v626
        %v628 = vand.u32 %v627, 4294901760
        %629 = vmatpush.msra.mxu0 %v628
        %v630 = vand.u32 %v240, 4294901760
        %631 = vmatmul.f32.gmra.mxu0 %v630
        %v632 = vpop.f32.mrf.mxu0
        %v633 = vadd.f32 %v359, %v632
        %v634 = vand.u32 %v243, 4294901760
        %635 = vmatmul.f32.gmra.mxu0 %v634
        %v636 = vpop.f32.mrf.mxu0
        %v637 = vadd.f32 %v367, %v636
        %v638 = vand.u32 %v246, 4294901760
        %639 = vmatmul.f32.gmra.mxu0 %v638
        %v640 = vpop.f32.mrf.mxu0
        %v641 = vadd.f32 %v375, %v640
        %v642 = vand.u32 %v249, 4294901760
        %643 = vmatmul.f32.gmra.mxu0 %v642
        %v644 = vpop.f32.mrf.mxu0
        %v645 = vadd.f32 %v383, %v644
        %v646 = vand.u32 %v252, 4294901760
        %647 = vmatmul.f32.gmra.mxu0 %v646
        %v648 = vpop.f32.mrf.mxu0
        %v649 = vadd.f32 %v391, %v648
        %v650 = vand.u32 %v255, 4294901760
        %651 = vmatmul.f32.gmra.mxu0 %v650
        %v652 = vpop.f32.mrf.mxu0
        %v653 = vadd.f32 %v399, %v652
        %v654 = vand.u32 %v258, 4294901760
        %655 = vmatmul.f32.gmra.mxu0 %v654
        %v656 = vpop.f32.mrf.mxu0
        %v657 = vadd.f32 %v407, %v656
        %v658 = vand.u32 %v261, 4294901760
        %659 = vmatmul.f32.gmra.mxu0 %v658
        %v660 = vpop.f32.mrf.mxu0
        %v661 = vadd.f32 %v415, %v660
        %v662 = vand.u32 %v264, 4294901760
        %663 = vmatmul.f32.gmra.mxu0 %v662
        %v664 = vpop.f32.mrf.mxu0
        %v665 = vadd.f32 %v423, %v664
        %v666 = vand.u32 %v267, 4294901760
        %667 = vmatmul.f32.gmra.mxu0 %v666
        %v668 = vpop.f32.mrf.mxu0
        %v669 = vadd.f32 %v431, %v668
        %v670 = vand.u32 %v270, 4294901760
        %671 = vmatmul.f32.gmra.mxu0 %v670
        %v672 = vpop.f32.mrf.mxu0
        %v673 = vadd.f32 %v439, %v672
        %v674 = vand.u32 %v273, 4294901760
        %675 = vmatmul.f32.gmra.mxu0 %v674
        %v676 = vpop.f32.mrf.mxu0
        %v677 = vadd.f32 %v447, %v676
        %v678 = vand.u32 %v276, 4294901760
        %679 = vmatmul.f32.gmra.mxu0 %v678
        %v680 = vpop.f32.mrf.mxu0
        %v681 = vadd.f32 %v455, %v680
        %v682 = vand.u32 %v279, 4294901760
        %683 = vmatmul.f32.gmra.mxu0 %v682
        %v684 = vpop.f32.mrf.mxu0
        %v685 = vadd.f32 %v463, %v684
        %v686 = vand.u32 %v282, 4294901760
        %687 = vmatmul.f32.gmra.mxu0 %v686
        %v688 = vpop.f32.mrf.mxu0
        %v689 = vadd.f32 %v471, %v688
        %v690 = vand.u32 %v285, 4294901760
        %691 = vmatmul.f32.gmra.mxu0 %v690
        %v692 = vpop.f32.mrf.mxu0
        %v693 = vadd.f32 %v479, %v692
        %v694 = vand.u32 %v288, 4294901760
        %695 = vmatmul.f32.gmra.mxu0 %v694
        %v696 = vpop.f32.mrf.mxu0
        %v697 = vadd.f32 %v487, %v696
        %v698 = vand.u32 %v291, 4294901760
        %699 = vmatmul.f32.gmra.mxu0 %v698
        %v700 = vpop.f32.mrf.mxu0
        %v701 = vadd.f32 %v495, %v700
        %v702 = vand.u32 %v294, 4294901760
        %703 = vmatmul.f32.gmra.mxu0 %v702
        %v704 = vpop.f32.mrf.mxu0
        %v705 = vadd.f32 %v503, %v704
        %v706 = vand.u32 %v297, 4294901760
        %707 = vmatmul.f32.gmra.mxu0 %v706
        %v708 = vpop.f32.mrf.mxu0
        %v709 = vadd.f32 %v511, %v708
        %v710 = vand.u32 %v300, 4294901760
        %711 = vmatmul.f32.gmra.mxu0 %v710
        %v712 = vpop.f32.mrf.mxu0
        %v713 = vadd.f32 %v519, %v712
        %v714 = vand.u32 %v303, 4294901760
        %715 = vmatmul.f32.gmra.mxu0 %v714
        %v716 = vpop.f32.mrf.mxu0
        %v717 = vadd.f32 %v527, %v716
        %v718 = vand.u32 %v306, 4294901760
        %719 = vmatmul.f32.gmra.mxu0 %v718
        %v720 = vpop.f32.mrf.mxu0
        %v721 = vadd.f32 %v535, %v720
        %v722 = vand.u32 %v309, 4294901760
        %723 = vmatmul.f32.gmra.mxu0 %v722
        %v724 = vpop.f32.mrf.mxu0
        %v725 = vadd.f32 %v543, %v724
        %v726 = vand.u32 %v312, 4294901760
        %727 = vmatmul.f32.gmra.mxu0 %v726
        %v728 = vpop.f32.mrf.mxu0
        %v729 = vadd.f32 %v551, %v728
        %v730 = vand.u32 %v315, 4294901760
        %731 = vmatmul.f32.gmra.mxu0 %v730
        %v732 = vpop.f32.mrf.mxu0
        %v733 = vadd.f32 %v559, %v732
        %v734 = vand.u32 %v318, 4294901760
        %735 = vmatmul.f32.gmra.mxu0 %v734
        %v736 = vpop.f32.mrf.mxu0
        %v737 = vadd.f32 %v567, %v736
        %v738 = vand.u32 %v321, 4294901760
        %739 = vmatmul.f32.gmra.mxu0 %v738
        %v740 = vpop.f32.mrf.mxu0
        %v741 = vadd.f32 %v575, %v740
        %v742 = vand.u32 %v324, 4294901760
        %743 = vmatmul.f32.gmra.mxu0 %v742
        %v744 = vpop.f32.mrf.mxu0
        %v745 = vadd.f32 %v583, %v744
        %v746 = vand.u32 %v327, 4294901760
        %747 = vmatmul.f32.gmra.mxu0 %v746
        %v748 = vpop.f32.mrf.mxu0
        %v749 = vadd.f32 %v591, %v748
        %v750 = vand.u32 %v330, 4294901760
        %751 = vmatmul.f32.gmra.mxu0 %v750
        %v752 = vpop.f32.mrf.mxu0
        %v753 = vadd.f32 %v599, %v752
        %v754 = vand.u32 %v333, 4294901760
        %755 = vmatmul.f32.gmra.mxu0 %v754
        %v756 = vpop.f32.mrf.mxu0
        %v757 = vadd.f32 %v607, %v756
        %758 = vdwg.mxu0
        %759 = vmatpush.msra.mxu0 0.0
        %760 = vmatpush.msra.mxu0 0.0
        %761 = vmatpush.msra.mxu0 0.0
        %762 = vmatpush.msra.mxu0 0.0
        %763 = vmatpush.msra.mxu0 0.0
        %764 = vmatpush.msra.mxu0 0.0
        %765 = vmatpush.msra.mxu0 0.0
        %766 = vmatpush.msra.mxu0 0.0
        %767 = vmatpush.msra.mxu0 0.0
        %768 = vmatpush.msra.mxu0 0.0
        %769 = vmatpush.msra.mxu0 0.0
        %770 = vmatpush.msra.mxu0 0.0
        %771 = vmatpush.msra.mxu0 0.0
        %772 = vmatpush.msra.mxu0 0.0
        %773 = vmatpush.msra.mxu0 0.0
        %v774 = vand.u32 %v237, 4294901760
        %v775 = vsub.f32 %v237, %v774
        %776 = vmatpush.msra.mxu0 %v775
        %v777 = vand.u32 %v240, 4294901760
        %v778 = vsub.f32 %v240, %v777
        %779 = vmatmul.f32.gmra.mxu0 %v778
        %v780 = vpop.f32.mrf.mxu0
        %v781 = vadd.f32 %v633, %v780
        %v782 = vand.u32 %v243, 4294901760
        %v783 = vsub.f32 %v243, %v782
        %784 = vmatmul.f32.gmra.mxu0 %v783
        %v785 = vpop.f32.mrf.mxu0
        %v786 = vadd.f32 %v637, %v785
        %v787 = vand.u32 %v246, 4294901760
        %v788 = vsub.f32 %v246, %v787
        %789 = vmatmul.f32.gmra.mxu0 %v788
        %v790 = vpop.f32.mrf.mxu0
        %v791 = vadd.f32 %v641, %v790
        %v792 = vand.u32 %v249, 4294901760
        %v793 = vsub.f32 %v249, %v792
        %794 = vmatmul.f32.gmra.mxu0 %v793
        %v795 = vpop.f32.mrf.mxu0
        %v796 = vadd.f32 %v645, %v795
        %v797 = vand.u32 %v252, 4294901760
        %v798 = vsub.f32 %v252, %v797
        %799 = vmatmul.f32.gmra.mxu0 %v798
        %v800 = vpop.f32.mrf.mxu0
        %v801 = vadd.f32 %v649, %v800
        %v802 = vand.u32 %v255, 4294901760
        %v803 = vsub.f32 %v255, %v802
        %804 = vmatmul.f32.gmra.mxu0 %v803
        %v805 = vpop.f32.mrf.mxu0
        %v806 = vadd.f32 %v653, %v805
        %v807 = vand.u32 %v258, 4294901760
        %v808 = vsub.f32 %v258, %v807
        %809 = vmatmul.f32.gmra.mxu0 %v808
        %v810 = vpop.f32.mrf.mxu0
        %v811 = vadd.f32 %v657, %v810
        %v812 = vand.u32 %v261, 4294901760
        %v813 = vsub.f32 %v261, %v812
        %814 = vmatmul.f32.gmra.mxu0 %v813
        %v815 = vpop.f32.mrf.mxu0
        %v816 = vadd.f32 %v661, %v815
        %v817 = vand.u32 %v264, 4294901760
        %v818 = vsub.f32 %v264, %v817
        %819 = vmatmul.f32.gmra.mxu0 %v818
        %v820 = vpop.f32.mrf.mxu0
        %v821 = vadd.f32 %v665, %v820
        %v822 = vand.u32 %v267, 4294901760
        %v823 = vsub.f32 %v267, %v822
        %824 = vmatmul.f32.gmra.mxu0 %v823
        %v825 = vpop.f32.mrf.mxu0
        %v826 = vadd.f32 %v669, %v825
        %v827 = vand.u32 %v270, 4294901760
        %v828 = vsub.f32 %v270, %v827
        %829 = vmatmul.f32.gmra.mxu0 %v828
        %v830 = vpop.f32.mrf.mxu0
        %v831 = vadd.f32 %v673, %v830
        %v832 = vand.u32 %v273, 4294901760
        %v833 = vsub.f32 %v273, %v832
        %834 = vmatmul.f32.gmra.mxu0 %v833
        %v835 = vpop.f32.mrf.mxu0
        %v836 = vadd.f32 %v677, %v835
        %v837 = vand.u32 %v276, 4294901760
        %v838 = vsub.f32 %v276, %v837
        %839 = vmatmul.f32.gmra.mxu0 %v838
        %v840 = vpop.f32.mrf.mxu0
        %v841 = vadd.f32 %v681, %v840
        %v842 = vand.u32 %v279, 4294901760
        %v843 = vsub.f32 %v279, %v842
        %844 = vmatmul.f32.gmra.mxu0 %v843
        %v845 = vpop.f32.mrf.mxu0
        %v846 = vadd.f32 %v685, %v845
        %v847 = vand.u32 %v282, 4294901760
        %v848 = vsub.f32 %v282, %v847
        %849 = vmatmul.f32.gmra.mxu0 %v848
        %v850 = vpop.f32.mrf.mxu0
        %v851 = vadd.f32 %v689, %v850
        %v852 = vand.u32 %v285, 4294901760
        %v853 = vsub.f32 %v285, %v852
        %854 = vmatmul.f32.gmra.mxu0 %v853
        %v855 = vpop.f32.mrf.mxu0
        %v856 = vadd.f32 %v693, %v855
        %v857 = vand.u32 %v288, 4294901760
        %v858 = vsub.f32 %v288, %v857
        %859 = vmatmul.f32.gmra.mxu0 %v858
        %v860 = vpop.f32.mrf.mxu0
        %v861 = vadd.f32 %v697, %v860
        %v862 = vand.u32 %v291, 4294901760
        %v863 = vsub.f32 %v291, %v862
        %864 = vmatmul.f32.gmra.mxu0 %v863
        %v865 = vpop.f32.mrf.mxu0
        %v866 = vadd.f32 %v701, %v865
        %v867 = vand.u32 %v294, 4294901760
        %v868 = vsub.f32 %v294, %v867
        %869 = vmatmul.f32.gmra.mxu0 %v868
        %v870 = vpop.f32.mrf.mxu0
        %v871 = vadd.f32 %v705, %v870
        %v872 = vand.u32 %v297, 4294901760
        %v873 = vsub.f32 %v297, %v872
        %874 = vmatmul.f32.gmra.mxu0 %v873
        %v875 = vpop.f32.mrf.mxu0
        %v876 = vadd.f32 %v709, %v875
        %v877 = vand.u32 %v300, 4294901760
        %v878 = vsub.f32 %v300, %v877
        %879 = vmatmul.f32.gmra.mxu0 %v878
        %v880 = vpop.f32.mrf.mxu0
        %v881 = vadd.f32 %v713, %v880
        %v882 = vand.u32 %v303, 4294901760
        %v883 = vsub.f32 %v303, %v882
        %884 = vmatmul.f32.gmra.mxu0 %v883
        %v885 = vpop.f32.mrf.mxu0
        %v886 = vadd.f32 %v717, %v885
        %v887 = vand.u32 %v306, 4294901760
        %v888 = vsub.f32 %v306, %v887
        %889 = vmatmul.f32.gmra.mxu0 %v888
        %v890 = vpop.f32.mrf.mxu0
        %v891 = vadd.f32 %v721, %v890
        %v892 = vand.u32 %v309, 4294901760
        %v893 = vsub.f32 %v309, %v892
        %894 = vmatmul.f32.gmra.mxu0 %v893
        %v895 = vpop.f32.mrf.mxu0
        %v896 = vadd.f32 %v725, %v895
        %v897 = vand.u32 %v312, 4294901760
        %v898 = vsub.f32 %v312, %v897
        %899 = vmatmul.f32.gmra.mxu0 %v898
        %v900 = vpop.f32.mrf.mxu0
        %v901 = vadd.f32 %v729, %v900
        %v902 = vand.u32 %v315, 4294901760
        %v903 = vsub.f32 %v315, %v902
        %904 = vmatmul.f32.gmra.mxu0 %v903
        %v905 = vpop.f32.mrf.mxu0
        %v906 = vadd.f32 %v733, %v905
        %v907 = vand.u32 %v318, 4294901760
        %v908 = vsub.f32 %v318, %v907
        %909 = vmatmul.f32.gmra.mxu0 %v908
        %v910 = vpop.f32.mrf.mxu0
        %v911 = vadd.f32 %v737, %v910
        %v912 = vand.u32 %v321, 4294901760
        %v913 = vsub.f32 %v321, %v912
        %914 = vmatmul.f32.gmra.mxu0 %v913
        %v915 = vpop.f32.mrf.mxu0
        %v916 = vadd.f32 %v741, %v915
        %v917 = vand.u32 %v324, 4294901760
        %v918 = vsub.f32 %v324, %v917
        %919 = vmatmul.f32.gmra.mxu0 %v918
        %v920 = vpop.f32.mrf.mxu0
        %v921 = vadd.f32 %v745, %v920
        %v922 = vand.u32 %v327, 4294901760
        %v923 = vsub.f32 %v327, %v922
        %924 = vmatmul.f32.gmra.mxu0 %v923
        %v925 = vpop.f32.mrf.mxu0
        %v926 = vadd.f32 %v749, %v925
        %v927 = vand.u32 %v330, 4294901760
        %v928 = vsub.f32 %v330, %v927
        %929 = vmatmul.f32.gmra.mxu0 %v928
        %v930 = vpop.f32.mrf.mxu0
        %v931 = vadd.f32 %v753, %v930
        %v932 = vand.u32 %v333, 4294901760
        %v933 = vsub.f32 %v333, %v932
        %934 = vmatmul.f32.gmra.mxu0 %v933
        %v935 = vpop.f32.mrf.mxu0
        %v936 = vadd.f32 %v757, %v935
        %937 = vdwg.mxu0
        %938 = vmatpush.msra.mxu0 0.0
        %939 = vmatpush.msra.mxu0 0.0
        %940 = vmatpush.msra.mxu0 0.0
        %941 = vmatpush.msra.mxu0 0.0
        %942 = vmatpush.msra.mxu0 0.0
        %943 = vmatpush.msra.mxu0 0.0
        %944 = vmatpush.msra.mxu0 0.0
        %945 = vmatpush.msra.mxu0 0.0
        %946 = vmatpush.msra.mxu0 0.0
        %947 = vmatpush.msra.mxu0 0.0
        %948 = vmatpush.msra.mxu0 0.0
        %949 = vmatpush.msra.mxu0 0.0
        %950 = vmatpush.msra.mxu0 0.0
        %951 = vmatpush.msra.mxu0 0.0
        %952 = vmatpush.msra.mxu0 0.0
        %v953 = vand.u32 %v237, 4294901760
        %954 = vmatpush.msra.mxu0 %v953
        %v955 = vand.u32 %v240, 4294901760
        %v956 = vsub.f32 %v240, %v955
        %v957 = vand.u32 %v956, 4294901760
        %958 = vmatmul.f32.gmra.mxu0 %v957
        %v959 = vpop.f32.mrf.mxu0
        %v960 = vadd.f32 %v781, %v959
        %v961 = vand.u32 %v243, 4294901760
        %v962 = vsub.f32 %v243, %v961
        %v963 = vand.u32 %v962, 4294901760
        %964 = vmatmul.f32.gmra.mxu0 %v963
        %v965 = vpop.f32.mrf.mxu0
        %v966 = vadd.f32 %v786, %v965
        %v967 = vand.u32 %v246, 4294901760
        %v968 = vsub.f32 %v246, %v967
        %v969 = vand.u32 %v968, 4294901760
        %970 = vmatmul.f32.gmra.mxu0 %v969
        %v971 = vpop.f32.mrf.mxu0
        %v972 = vadd.f32 %v791, %v971
        %v973 = vand.u32 %v249, 4294901760
        %v974 = vsub.f32 %v249, %v973
        %v975 = vand.u32 %v974, 4294901760
        %976 = vmatmul.f32.gmra.mxu0 %v975
        %v977 = vpop.f32.mrf.mxu0
        %v978 = vadd.f32 %v796, %v977
        %v979 = vand.u32 %v252, 4294901760
        %v980 = vsub.f32 %v252, %v979
        %v981 = vand.u32 %v980, 4294901760
        %982 = vmatmul.f32.gmra.mxu0 %v981
        %v983 = vpop.f32.mrf.mxu0
        %v984 = vadd.f32 %v801, %v983
        %v985 = vand.u32 %v255, 4294901760
        %v986 = vsub.f32 %v255, %v985
        %v987 = vand.u32 %v986, 4294901760
        %988 = vmatmul.f32.gmra.mxu0 %v987
        %v989 = vpop.f32.mrf.mxu0
        %v990 = vadd.f32 %v806, %v989
        %v991 = vand.u32 %v258, 4294901760
        %v992 = vsub.f32 %v258, %v991
        %v993 = vand.u32 %v992, 4294901760
        %994 = vmatmul.f32.gmra.mxu0 %v993
        %v995 = vpop.f32.mrf.mxu0
        %v996 = vadd.f32 %v811, %v995
        %v997 = vand.u32 %v261, 4294901760
        %v998 = vsub.f32 %v261, %v997
        %v999 = vand.u32 %v998, 4294901760
        %1000 = vmatmul.f32.gmra.mxu0 %v999
        %v1001 = vpop.f32.mrf.mxu0
        %v1002 = vadd.f32 %v816, %v1001
        %v1003 = vand.u32 %v264, 4294901760
        %v1004 = vsub.f32 %v264, %v1003
        %v1005 = vand.u32 %v1004, 4294901760
        %1006 = vmatmul.f32.gmra.mxu0 %v1005
        %v1007 = vpop.f32.mrf.mxu0
        %v1008 = vadd.f32 %v821, %v1007
        %v1009 = vand.u32 %v267, 4294901760
        %v1010 = vsub.f32 %v267, %v1009
        %v1011 = vand.u32 %v1010, 4294901760
        %1012 = vmatmul.f32.gmra.mxu0 %v1011
        %v1013 = vpop.f32.mrf.mxu0
        %v1014 = vadd.f32 %v826, %v1013
        %v1015 = vand.u32 %v270, 4294901760
        %v1016 = vsub.f32 %v270, %v1015
        %v1017 = vand.u32 %v1016, 4294901760
        %1018 = vmatmul.f32.gmra.mxu0 %v1017
        %v1019 = vpop.f32.mrf.mxu0
        %v1020 = vadd.f32 %v831, %v1019
        %v1021 = vand.u32 %v273, 4294901760
        %v1022 = vsub.f32 %v273, %v1021
        %v1023 = vand.u32 %v1022, 4294901760
        %1024 = vmatmul.f32.gmra.mxu0 %v1023
        %v1025 = vpop.f32.mrf.mxu0
        %v1026 = vadd.f32 %v836, %v1025
        %v1027 = vand.u32 %v276, 4294901760
        %v1028 = vsub.f32 %v276, %v1027
        %v1029 = vand.u32 %v1028, 4294901760
        %1030 = vmatmul.f32.gmra.mxu0 %v1029
        %v1031 = vpop.f32.mrf.mxu0
        %v1032 = vadd.f32 %v841, %v1031
        %v1033 = vand.u32 %v279, 4294901760
        %v1034 = vsub.f32 %v279, %v1033
        %v1035 = vand.u32 %v1034, 4294901760
        %1036 = vmatmul.f32.gmra.mxu0 %v1035
        %v1037 = vpop.f32.mrf.mxu0
        %v1038 = vadd.f32 %v846, %v1037
        %v1039 = vand.u32 %v282, 4294901760
        %v1040 = vsub.f32 %v282, %v1039
        %v1041 = vand.u32 %v1040, 4294901760
        %1042 = vmatmul.f32.gmra.mxu0 %v1041
        %v1043 = vpop.f32.mrf.mxu0
        %v1044 = vadd.f32 %v851, %v1043
        %v1045 = vand.u32 %v285, 4294901760
        %v1046 = vsub.f32 %v285, %v1045
        %v1047 = vand.u32 %v1046, 4294901760
        %1048 = vmatmul.f32.gmra.mxu0 %v1047
        %v1049 = vpop.f32.mrf.mxu0
        %v1050 = vadd.f32 %v856, %v1049
        %v1051 = vand.u32 %v288, 4294901760
        %v1052 = vsub.f32 %v288, %v1051
        %v1053 = vand.u32 %v1052, 4294901760
        %1054 = vmatmul.f32.gmra.mxu0 %v1053
        %v1055 = vpop.f32.mrf.mxu0
        %v1056 = vadd.f32 %v861, %v1055
        %v1057 = vand.u32 %v291, 4294901760
        %v1058 = vsub.f32 %v291, %v1057
        %v1059 = vand.u32 %v1058, 4294901760
        %1060 = vmatmul.f32.gmra.mxu0 %v1059
        %v1061 = vpop.f32.mrf.mxu0
        %v1062 = vadd.f32 %v866, %v1061
        %v1063 = vand.u32 %v294, 4294901760
        %v1064 = vsub.f32 %v294, %v1063
        %v1065 = vand.u32 %v1064, 4294901760
        %1066 = vmatmul.f32.gmra.mxu0 %v1065
        %v1067 = vpop.f32.mrf.mxu0
        %v1068 = vadd.f32 %v871, %v1067
        %v1069 = vand.u32 %v297, 4294901760
        %v1070 = vsub.f32 %v297, %v1069
        %v1071 = vand.u32 %v1070, 4294901760
        %1072 = vmatmul.f32.gmra.mxu0 %v1071
        %v1073 = vpop.f32.mrf.mxu0
        %v1074 = vadd.f32 %v876, %v1073
        %v1075 = vand.u32 %v300, 4294901760
        %v1076 = vsub.f32 %v300, %v1075
        %v1077 = vand.u32 %v1076, 4294901760
        %1078 = vmatmul.f32.gmra.mxu0 %v1077
        %v1079 = vpop.f32.mrf.mxu0
        %v1080 = vadd.f32 %v881, %v1079
        %v1081 = vand.u32 %v303, 4294901760
        %v1082 = vsub.f32 %v303, %v1081
        %v1083 = vand.u32 %v1082, 4294901760
        %1084 = vmatmul.f32.gmra.mxu0 %v1083
        %v1085 = vpop.f32.mrf.mxu0
        %v1086 = vadd.f32 %v886, %v1085
        %v1087 = vand.u32 %v306, 4294901760
        %v1088 = vsub.f32 %v306, %v1087
        %v1089 = vand.u32 %v1088, 4294901760
        %1090 = vmatmul.f32.gmra.mxu0 %v1089
        %v1091 = vpop.f32.mrf.mxu0
        %v1092 = vadd.f32 %v891, %v1091
        %v1093 = vand.u32 %v309, 4294901760
        %v1094 = vsub.f32 %v309, %v1093
        %v1095 = vand.u32 %v1094, 4294901760
        %1096 = vmatmul.f32.gmra.mxu0 %v1095
        %v1097 = vpop.f32.mrf.mxu0
        %v1098 = vadd.f32 %v896, %v1097
        %v1099 = vand.u32 %v312, 4294901760
        %v1100 = vsub.f32 %v312, %v1099
        %v1101 = vand.u32 %v1100, 4294901760
        %1102 = vmatmul.f32.gmra.mxu0 %v1101
        %v1103 = vpop.f32.mrf.mxu0
        %v1104 = vadd.f32 %v901, %v1103
        %v1105 = vand.u32 %v315, 4294901760
        %v1106 = vsub.f32 %v315, %v1105
        %v1107 = vand.u32 %v1106, 4294901760
        %1108 = vmatmul.f32.gmra.mxu0 %v1107
        %v1109 = vpop.f32.mrf.mxu0
        %v1110 = vadd.f32 %v906, %v1109
        %v1111 = vand.u32 %v318, 4294901760
        %v1112 = vsub.f32 %v318, %v1111
        %v1113 = vand.u32 %v1112, 4294901760
        %1114 = vmatmul.f32.gmra.mxu0 %v1113
        %v1115 = vpop.f32.mrf.mxu0
        %v1116 = vadd.f32 %v911, %v1115
        %v1117 = vand.u32 %v321, 4294901760
        %v1118 = vsub.f32 %v321, %v1117
        %v1119 = vand.u32 %v1118, 4294901760
        %1120 = vmatmul.f32.gmra.mxu0 %v1119
        %v1121 = vpop.f32.mrf.mxu0
        %v1122 = vadd.f32 %v916, %v1121
        %v1123 = vand.u32 %v324, 4294901760
        %v1124 = vsub.f32 %v324, %v1123
        %v1125 = vand.u32 %v1124, 4294901760
        %1126 = vmatmul.f32.gmra.mxu0 %v1125
        %v1127 = vpop.f32.mrf.mxu0
        %v1128 = vadd.f32 %v921, %v1127
        %v1129 = vand.u32 %v327, 4294901760
        %v1130 = vsub.f32 %v327, %v1129
        %v1131 = vand.u32 %v1130, 4294901760
        %1132 = vmatmul.f32.gmra.mxu0 %v1131
        %v1133 = vpop.f32.mrf.mxu0
        %v1134 = vadd.f32 %v926, %v1133
        %v1135 = vand.u32 %v330, 4294901760
        %v1136 = vsub.f32 %v330, %v1135
        %v1137 = vand.u32 %v1136, 4294901760
        %1138 = vmatmul.f32.gmra.mxu0 %v1137
        %v1139 = vpop.f32.mrf.mxu0
        %v1140 = vadd.f32 %v931, %v1139
        %v1141 = vand.u32 %v333, 4294901760
        %v1142 = vsub.f32 %v333, %v1141
        %v1143 = vand.u32 %v1142, 4294901760
        %1144 = vmatmul.f32.gmra.mxu0 %v1143
        %v1145 = vpop.f32.mrf.mxu0
        %v1146 = vadd.f32 %v936, %v1145
        %1147 = vdwg.mxu0
        %1148 = vmatpush.msra.mxu0 0.0
        %1149 = vmatpush.msra.mxu0 0.0
        %1150 = vmatpush.msra.mxu0 0.0
        %1151 = vmatpush.msra.mxu0 0.0
        %1152 = vmatpush.msra.mxu0 0.0
        %1153 = vmatpush.msra.mxu0 0.0
        %1154 = vmatpush.msra.mxu0 0.0
        %1155 = vmatpush.msra.mxu0 0.0
        %1156 = vmatpush.msra.mxu0 0.0
        %1157 = vmatpush.msra.mxu0 0.0
        %1158 = vmatpush.msra.mxu0 0.0
        %1159 = vmatpush.msra.mxu0 0.0
        %1160 = vmatpush.msra.mxu0 0.0
        %1161 = vmatpush.msra.mxu0 0.0
        %1162 = vmatpush.msra.mxu0 0.0
        %v1163 = vand.u32 %v237, 4294901760
        %v1164 = vsub.f32 %v237, %v1163
        %v1165 = vand.u32 %v1164, 4294901760
        %1166 = vmatpush.msra.mxu0 %v1165
        %v1167 = vand.u32 %v240, 4294901760
        %1168 = vmatmul.f32.gmra.mxu0 %v1167
        %v1169 = vpop.f32.mrf.mxu0
        %v1170 = vadd.f32 %v960, %v1169
        %v1171 = vand.u32 %v243, 4294901760
        %1172 = vmatmul.f32.gmra.mxu0 %v1171
        %v1173 = vpop.f32.mrf.mxu0
        %v1174 = vadd.f32 %v966, %v1173
        %v1175 = vand.u32 %v246, 4294901760
        %1176 = vmatmul.f32.gmra.mxu0 %v1175
        %v1177 = vpop.f32.mrf.mxu0
        %v1178 = vadd.f32 %v972, %v1177
        %v1179 = vand.u32 %v249, 4294901760
        %1180 = vmatmul.f32.gmra.mxu0 %v1179
        %v1181 = vpop.f32.mrf.mxu0
        %v1182 = vadd.f32 %v978, %v1181
        %v1183 = vand.u32 %v252, 4294901760
        %1184 = vmatmul.f32.gmra.mxu0 %v1183
        %v1185 = vpop.f32.mrf.mxu0
        %v1186 = vadd.f32 %v984, %v1185
        %v1187 = vand.u32 %v255, 4294901760
        %1188 = vmatmul.f32.gmra.mxu0 %v1187
        %v1189 = vpop.f32.mrf.mxu0
        %v1190 = vadd.f32 %v990, %v1189
        %v1191 = vand.u32 %v258, 4294901760
        %1192 = vmatmul.f32.gmra.mxu0 %v1191
        %v1193 = vpop.f32.mrf.mxu0
        %v1194 = vadd.f32 %v996, %v1193
        %v1195 = vand.u32 %v261, 4294901760
        %1196 = vmatmul.f32.gmra.mxu0 %v1195
        %v1197 = vpop.f32.mrf.mxu0
        %v1198 = vadd.f32 %v1002, %v1197
        %v1199 = vand.u32 %v264, 4294901760
        %1200 = vmatmul.f32.gmra.mxu0 %v1199
        %v1201 = vpop.f32.mrf.mxu0
        %v1202 = vadd.f32 %v1008, %v1201
        %v1203 = vand.u32 %v267, 4294901760
        %1204 = vmatmul.f32.gmra.mxu0 %v1203
        %v1205 = vpop.f32.mrf.mxu0
        %v1206 = vadd.f32 %v1014, %v1205
        %v1207 = vand.u32 %v270, 4294901760
        %1208 = vmatmul.f32.gmra.mxu0 %v1207
        %v1209 = vpop.f32.mrf.mxu0
        %v1210 = vadd.f32 %v1020, %v1209
        %v1211 = vand.u32 %v273, 4294901760
        %1212 = vmatmul.f32.gmra.mxu0 %v1211
        %v1213 = vpop.f32.mrf.mxu0
        %v1214 = vadd.f32 %v1026, %v1213
        %v1215 = vand.u32 %v276, 4294901760
        %1216 = vmatmul.f32.gmra.mxu0 %v1215
        %v1217 = vpop.f32.mrf.mxu0
        %v1218 = vadd.f32 %v1032, %v1217
        %v1219 = vand.u32 %v279, 4294901760
        %1220 = vmatmul.f32.gmra.mxu0 %v1219
        %v1221 = vpop.f32.mrf.mxu0
        %v1222 = vadd.f32 %v1038, %v1221
        %v1223 = vand.u32 %v282, 4294901760
        %1224 = vmatmul.f32.gmra.mxu0 %v1223
        %v1225 = vpop.f32.mrf.mxu0
        %v1226 = vadd.f32 %v1044, %v1225
        %v1227 = vand.u32 %v285, 4294901760
        %1228 = vmatmul.f32.gmra.mxu0 %v1227
        %v1229 = vpop.f32.mrf.mxu0
        %v1230 = vadd.f32 %v1050, %v1229
        %v1231 = vand.u32 %v288, 4294901760
        %1232 = vmatmul.f32.gmra.mxu0 %v1231
        %v1233 = vpop.f32.mrf.mxu0
        %v1234 = vadd.f32 %v1056, %v1233
        %v1235 = vand.u32 %v291, 4294901760
        %1236 = vmatmul.f32.gmra.mxu0 %v1235
        %v1237 = vpop.f32.mrf.mxu0
        %v1238 = vadd.f32 %v1062, %v1237
        %v1239 = vand.u32 %v294, 4294901760
        %1240 = vmatmul.f32.gmra.mxu0 %v1239
        %v1241 = vpop.f32.mrf.mxu0
        %v1242 = vadd.f32 %v1068, %v1241
        %v1243 = vand.u32 %v297, 4294901760
        %1244 = vmatmul.f32.gmra.mxu0 %v1243
        %v1245 = vpop.f32.mrf.mxu0
        %v1246 = vadd.f32 %v1074, %v1245
        %v1247 = vand.u32 %v300, 4294901760
        %1248 = vmatmul.f32.gmra.mxu0 %v1247
        %v1249 = vpop.f32.mrf.mxu0
        %v1250 = vadd.f32 %v1080, %v1249
        %v1251 = vand.u32 %v303, 4294901760
        %1252 = vmatmul.f32.gmra.mxu0 %v1251
        %v1253 = vpop.f32.mrf.mxu0
        %v1254 = vadd.f32 %v1086, %v1253
        %v1255 = vand.u32 %v306, 4294901760
        %1256 = vmatmul.f32.gmra.mxu0 %v1255
        %v1257 = vpop.f32.mrf.mxu0
        %v1258 = vadd.f32 %v1092, %v1257
        %v1259 = vand.u32 %v309, 4294901760
        %1260 = vmatmul.f32.gmra.mxu0 %v1259
        %v1261 = vpop.f32.mrf.mxu0
        %v1262 = vadd.f32 %v1098, %v1261
        %v1263 = vand.u32 %v312, 4294901760
        %1264 = vmatmul.f32.gmra.mxu0 %v1263
        %v1265 = vpop.f32.mrf.mxu0
        %v1266 = vadd.f32 %v1104, %v1265
        %v1267 = vand.u32 %v315, 4294901760
        %1268 = vmatmul.f32.gmra.mxu0 %v1267
        %v1269 = vpop.f32.mrf.mxu0
        %v1270 = vadd.f32 %v1110, %v1269
        %v1271 = vand.u32 %v318, 4294901760
        %1272 = vmatmul.f32.gmra.mxu0 %v1271
        %v1273 = vpop.f32.mrf.mxu0
        %v1274 = vadd.f32 %v1116, %v1273
        %v1275 = vand.u32 %v321, 4294901760
        %1276 = vmatmul.f32.gmra.mxu0 %v1275
        %v1277 = vpop.f32.mrf.mxu0
        %v1278 = vadd.f32 %v1122, %v1277
        %v1279 = vand.u32 %v324, 4294901760
        %1280 = vmatmul.f32.gmra.mxu0 %v1279
        %v1281 = vpop.f32.mrf.mxu0
        %v1282 = vadd.f32 %v1128, %v1281
        %v1283 = vand.u32 %v327, 4294901760
        %1284 = vmatmul.f32.gmra.mxu0 %v1283
        %v1285 = vpop.f32.mrf.mxu0
        %v1286 = vadd.f32 %v1134, %v1285
        %v1287 = vand.u32 %v330, 4294901760
        %1288 = vmatmul.f32.gmra.mxu0 %v1287
        %v1289 = vpop.f32.mrf.mxu0
        %v1290 = vadd.f32 %v1140, %v1289
        %v1291 = vand.u32 %v333, 4294901760
        %1292 = vmatmul.f32.gmra.mxu0 %v1291
        %v1293 = vpop.f32.mrf.mxu0
        %v1294 = vadd.f32 %v1146, %v1293
        %1295 = vdwg.mxu0
        %1296 = vmatpush.msra.mxu0 0.0
        %1297 = vmatpush.msra.mxu0 0.0
        %1298 = vmatpush.msra.mxu0 0.0
        %1299 = vmatpush.msra.mxu0 0.0
        %1300 = vmatpush.msra.mxu0 0.0
        %1301 = vmatpush.msra.mxu0 0.0
        %1302 = vmatpush.msra.mxu0 0.0
        %1303 = vmatpush.msra.mxu0 0.0
        %1304 = vmatpush.msra.mxu0 0.0
        %1305 = vmatpush.msra.mxu0 0.0
        %1306 = vmatpush.msra.mxu0 0.0
        %1307 = vmatpush.msra.mxu0 0.0
        %1308 = vmatpush.msra.mxu0 0.0
        %1309 = vmatpush.msra.mxu0 0.0
        %1310 = vmatpush.msra.mxu0 0.0
        %v1311 = vand.u32 %v237, 4294901760
        %1312 = vmatpush.msra.mxu0 %v1311
        %v1313 = vand.u32 %v240, 4294901760
        %1314 = vmatmul.f32.gmra.mxu0 %v1313
        %v1315 = vpop.f32.mrf.mxu0
        %v1316 = vadd.f32 %v1170, %v1315
        %v1317 = vand.u32 %v243, 4294901760
        %1318 = vmatmul.f32.gmra.mxu0 %v1317
        %v1319 = vpop.f32.mrf.mxu0
        %v1320 = vadd.f32 %v1174, %v1319
        %v1321 = vand.u32 %v246, 4294901760
        %1322 = vmatmul.f32.gmra.mxu0 %v1321
        %v1323 = vpop.f32.mrf.mxu0
        %v1324 = vadd.f32 %v1178, %v1323
        %v1325 = vand.u32 %v249, 4294901760
        %1326 = vmatmul.f32.gmra.mxu0 %v1325
        %v1327 = vpop.f32.mrf.mxu0
        %v1328 = vadd.f32 %v1182, %v1327
        %v1329 = vand.u32 %v252, 4294901760
        %1330 = vmatmul.f32.gmra.mxu0 %v1329
        %v1331 = vpop.f32.mrf.mxu0
        %v1332 = vadd.f32 %v1186, %v1331
        %v1333 = vand.u32 %v255, 4294901760
        %1334 = vmatmul.f32.gmra.mxu0 %v1333
        %v1335 = vpop.f32.mrf.mxu0
        %v1336 = vadd.f32 %v1190, %v1335
        %v1337 = vand.u32 %v258, 4294901760
        %1338 = vmatmul.f32.gmra.mxu0 %v1337
        %v1339 = vpop.f32.mrf.mxu0
        %v1340 = vadd.f32 %v1194, %v1339
        %v1341 = vand.u32 %v261, 4294901760
        %1342 = vmatmul.f32.gmra.mxu0 %v1341
        %v1343 = vpop.f32.mrf.mxu0
        %v1344 = vadd.f32 %v1198, %v1343
        %v1345 = vand.u32 %v264, 4294901760
        %1346 = vmatmul.f32.gmra.mxu0 %v1345
        %v1347 = vpop.f32.mrf.mxu0
        %v1348 = vadd.f32 %v1202, %v1347
        %v1349 = vand.u32 %v267, 4294901760
        %1350 = vmatmul.f32.gmra.mxu0 %v1349
        %v1351 = vpop.f32.mrf.mxu0
        %v1352 = vadd.f32 %v1206, %v1351
        %v1353 = vand.u32 %v270, 4294901760
        %1354 = vmatmul.f32.gmra.mxu0 %v1353
        %v1355 = vpop.f32.mrf.mxu0
        %v1356 = vadd.f32 %v1210, %v1355
        %v1357 = vand.u32 %v273, 4294901760
        %1358 = vmatmul.f32.gmra.mxu0 %v1357
        %v1359 = vpop.f32.mrf.mxu0
        %v1360 = vadd.f32 %v1214, %v1359
        %v1361 = vand.u32 %v276, 4294901760
        %1362 = vmatmul.f32.gmra.mxu0 %v1361
        %v1363 = vpop.f32.mrf.mxu0
        %v1364 = vadd.f32 %v1218, %v1363
        %v1365 = vand.u32 %v279, 4294901760
        %1366 = vmatmul.f32.gmra.mxu0 %v1365
        %v1367 = vpop.f32.mrf.mxu0
        %v1368 = vadd.f32 %v1222, %v1367
        %v1369 = vand.u32 %v282, 4294901760
        %1370 = vmatmul.f32.gmra.mxu0 %v1369
        %v1371 = vpop.f32.mrf.mxu0
        %v1372 = vadd.f32 %v1226, %v1371
        %v1373 = vand.u32 %v285, 4294901760
        %1374 = vmatmul.f32.gmra.mxu0 %v1373
        %v1375 = vpop.f32.mrf.mxu0
        %v1376 = vadd.f32 %v1230, %v1375
        %v1377 = vand.u32 %v288, 4294901760
        %1378 = vmatmul.f32.gmra.mxu0 %v1377
        %v1379 = vpop.f32.mrf.mxu0
        %v1380 = vadd.f32 %v1234, %v1379
        %v1381 = vand.u32 %v291, 4294901760
        %1382 = vmatmul.f32.gmra.mxu0 %v1381
        %v1383 = vpop.f32.mrf.mxu0
        %v1384 = vadd.f32 %v1238, %v1383
        %v1385 = vand.u32 %v294, 4294901760
        %1386 = vmatmul.f32.gmra.mxu0 %v1385
        %v1387 = vpop.f32.mrf.mxu0
        %v1388 = vadd.f32 %v1242, %v1387
        %v1389 = vand.u32 %v297, 4294901760
        %1390 = vmatmul.f32.gmra.mxu0 %v1389
        %v1391 = vpop.f32.mrf.mxu0
        %v1392 = vadd.f32 %v1246, %v1391
        %v1393 = vand.u32 %v300, 4294901760
        %1394 = vmatmul.f32.gmra.mxu0 %v1393
        %v1395 = vpop.f32.mrf.mxu0
        %v1396 = vadd.f32 %v1250, %v1395
        %v1397 = vand.u32 %v303, 4294901760
        %1398 = vmatmul.f32.gmra.mxu0 %v1397
        %v1399 = vpop.f32.mrf.mxu0
        %v1400 = vadd.f32 %v1254, %v1399
        %v1401 = vand.u32 %v306, 4294901760
        %1402 = vmatmul.f32.gmra.mxu0 %v1401
        %v1403 = vpop.f32.mrf.mxu0
        %v1404 = vadd.f32 %v1258, %v1403
        %v1405 = vand.u32 %v309, 4294901760
        %1406 = vmatmul.f32.gmra.mxu0 %v1405
        %v1407 = vpop.f32.mrf.mxu0
        %v1408 = vadd.f32 %v1262, %v1407
        %v1409 = vand.u32 %v312, 4294901760
        %1410 = vmatmul.f32.gmra.mxu0 %v1409
        %v1411 = vpop.f32.mrf.mxu0
        %v1412 = vadd.f32 %v1266, %v1411
        %v1413 = vand.u32 %v315, 4294901760
        %1414 = vmatmul.f32.gmra.mxu0 %v1413
        %v1415 = vpop.f32.mrf.mxu0
        %v1416 = vadd.f32 %v1270, %v1415
        %v1417 = vand.u32 %v318, 4294901760
        %1418 = vmatmul.f32.gmra.mxu0 %v1417
        %v1419 = vpop.f32.mrf.mxu0
        %v1420 = vadd.f32 %v1274, %v1419
        %v1421 = vand.u32 %v321, 4294901760
        %1422 = vmatmul.f32.gmra.mxu0 %v1421
        %v1423 = vpop.f32.mrf.mxu0
        %v1424 = vadd.f32 %v1278, %v1423
        %v1425 = vand.u32 %v324, 4294901760
        %1426 = vmatmul.f32.gmra.mxu0 %v1425
        %v1427 = vpop.f32.mrf.mxu0
        %v1428 = vadd.f32 %v1282, %v1427
        %v1429 = vand.u32 %v327, 4294901760
        %1430 = vmatmul.f32.gmra.mxu0 %v1429
        %v1431 = vpop.f32.mrf.mxu0
        %v1432 = vadd.f32 %v1286, %v1431
        %v1433 = vand.u32 %v330, 4294901760
        %1434 = vmatmul.f32.gmra.mxu0 %v1433
        %v1435 = vpop.f32.mrf.mxu0
        %v1436 = vadd.f32 %v1290, %v1435
        %v1437 = vand.u32 %v333, 4294901760
        %1438 = vmatmul.f32.gmra.mxu0 %v1437
        %v1439 = vpop.f32.mrf.mxu0
        %v1440 = vadd.f32 %v1294, %v1439
        %1441 = vdwg.mxu0
        %v1442 = vmin.f32 %v1316, 0.0
        %v1443 = vmin.f32 %v1320, 0.0
        %v1444 = vmin.f32 %v1324, 0.0
        %v1445 = vmin.f32 %v1328, 0.0
        %v1446 = vmin.f32 %v1332, 0.0
        %v1447 = vmin.f32 %v1336, 0.0
        %v1448 = vmin.f32 %v1340, 0.0
        %v1449 = vmin.f32 %v1344, 0.0
        %v1450 = vmin.f32 %v1348, 0.0
        %v1451 = vmin.f32 %v1352, 0.0
        %v1452 = vmin.f32 %v1356, 0.0
        %v1453 = vmin.f32 %v1360, 0.0
        %v1454 = vmin.f32 %v1364, 0.0
        %v1455 = vmin.f32 %v1368, 0.0
        %v1456 = vmin.f32 %v1372, 0.0
        %v1457 = vmin.f32 %v1376, 0.0
        %v1458 = vmin.f32 %v1380, 0.0
        %v1459 = vmin.f32 %v1384, 0.0
        %v1460 = vmin.f32 %v1388, 0.0
        %v1461 = vmin.f32 %v1392, 0.0
        %v1462 = vmin.f32 %v1396, 0.0
        %v1463 = vmin.f32 %v1400, 0.0
        %v1464 = vmin.f32 %v1404, 0.0
        %v1465 = vmin.f32 %v1408, 0.0
        %v1466 = vmin.f32 %v1412, 0.0
        %v1467 = vmin.f32 %v1416, 0.0
        %v1468 = vmin.f32 %v1420, 0.0
        %v1469 = vmin.f32 %v1424, 0.0
        %v1470 = vmin.f32 %v1428, 0.0
        %v1471 = vmin.f32 %v1432, 0.0
        %v1472 = vmin.f32 %v1436, 0.0
        %v1473 = vmin.f32 %v1440, 0.0
        %v1474 = vld [vmem:[#allocation2] sm:$0x1]
        %v1475 = vmul.f32 %v1442, 1.442695
        %v1476 = vpow.pop %v1475
        %v1477 = vmul.f32 %v1443, 1.442695
        %v1478 = vpow.pop %v1477
        %v1479 = vmul.f32 %v1444, 1.442695
        %v1480 = vpow.pop %v1479
        %v1481 = vmul.f32 %v1445, 1.442695
        %v1482 = vpow.pop %v1481
        %v1483 = vmul.f32 %v1446, 1.442695
        %v1484 = vpow.pop %v1483
        %v1485 = vmul.f32 %v1447, 1.442695
        %v1486 = vpow.pop %v1485
        %v1487 = vmul.f32 %v1448, 1.442695
        %v1488 = vpow.pop %v1487
        %v1489 = vmul.f32 %v1449, 1.442695
        %v1490 = vpow.pop %v1489
        %v1491 = vmul.f32 %v1450, 1.442695
        %v1492 = vpow.pop %v1491
        %v1493 = vmul.f32 %v1451, 1.442695
        %v1494 = vpow.pop %v1493
        %v1495 = vmul.f32 %v1452, 1.442695
        %v1496 = vpow.pop %v1495
        %v1497 = vmul.f32 %v1453, 1.442695
        %v1498 = vpow.pop %v1497
        %v1499 = vmul.f32 %v1454, 1.442695
        %v1500 = vpow.pop %v1499
        %v1501 = vmul.f32 %v1455, 1.442695
        %v1502 = vpow.pop %v1501
        %v1503 = vmul.f32 %v1456, 1.442695
        %v1504 = vpow.pop %v1503
        %v1505 = vmul.f32 %v1457, 1.442695
        %v1506 = vpow.pop %v1505
        %v1507 = vmul.f32 %v1458, 1.442695
        %v1508 = vpow.pop %v1507
        %v1509 = vmul.f32 %v1459, 1.442695
        %v1510 = vpow.pop %v1509
        %v1511 = vmul.f32 %v1460, 1.442695
        %v1512 = vpow.pop %v1511
        %v1513 = vmul.f32 %v1461, 1.442695
        %v1514 = vpow.pop %v1513
        %v1515 = vmul.f32 %v1462, 1.442695
        %v1516 = vpow.pop %v1515
        %v1517 = vmul.f32 %v1463, 1.442695
        %v1518 = vpow.pop %v1517
        %v1519 = vmul.f32 %v1464, 1.442695
        %v1520 = vpow.pop %v1519
        %v1521 = vmul.f32 %v1465, 1.442695
        %v1522 = vpow.pop %v1521
        %v1523 = vmul.f32 %v1466, 1.442695
        %v1524 = vpow.pop %v1523
        %v1525 = vmul.f32 %v1467, 1.442695
        %v1526 = vpow.pop %v1525
        %v1527 = vmul.f32 %v1468, 1.442695
        %v1528 = vpow.pop %v1527
        %v1529 = vmul.f32 %v1469, 1.442695
        %v1530 = vpow.pop %v1529
        %v1531 = vmul.f32 %v1470, 1.442695
        %v1532 = vpow.pop %v1531
        %v1533 = vmul.f32 %v1471, 1.442695
        %v1534 = vpow.pop %v1533
        %v1535 = vmul.f32 %v1472, 1.442695
        %v1536 = vpow.pop %v1535
        %v1537 = vmul.f32 %v1473, 1.442695
        %v1538 = vpow.pop %v1537
        %v1539 = vadd.f32 %v1476, %v1478
        %v1540 = vadd.f32 %v1539, %v1480
        %v1541 = vadd.f32 %v1540, %v1482
        %v1542 = vadd.f32 %v1541, %v1484
        %v1543 = vadd.f32 %v1542, %v1486
        %v1544 = vadd.f32 %v1543, %v1488
        %v1545 = vadd.f32 %v1544, %v1490
        %v1546 = vadd.f32 %v1545, %v1492
        %v1547 = vadd.f32 %v1546, %v1494
        %v1548 = vadd.f32 %v1547, %v1496
        %v1549 = vadd.f32 %v1548, %v1498
        %v1550 = vadd.f32 %v1549, %v1500
        %v1551 = vadd.f32 %v1550, %v1502
        %v1552 = vadd.f32 %v1551, %v1504
        %v1553 = vadd.f32 %v1552, %v1506
        %v1554 = vadd.f32 %v1553, %v1508
        %v1555 = vadd.f32 %v1554, %v1510
        %v1556 = vadd.f32 %v1555, %v1512
        %v1557 = vadd.f32 %v1556, %v1514
        %v1558 = vadd.f32 %v1557, %v1516
        %v1559 = vadd.f32 %v1558, %v1518
        %v1560 = vadd.f32 %v1559, %v1520
        %v1561 = vadd.f32 %v1560, %v1522
        %v1562 = vadd.f32 %v1561, %v1524
        %v1563 = vadd.f32 %v1562, %v1526
        %v1564 = vadd.f32 %v1563, %v1528
        %v1565 = vadd.f32 %v1564, %v1530
        %v1566 = vadd.f32 %v1565, %v1532
        %v1567 = vadd.f32 %v1566, %v1534
        %v1568 = vadd.f32 %v1567, %v1536
        %v1569 = vadd.f32 %v1568, %v1538
        %v1570 = vrot.slane %v1569, 4
        %v1571 = vadd.f32 %v1569, %v1570
        %v1572 = vrot.slane %v1571, 2
        %v1573 = vadd.f32 %v1571, %v1572
        %v1574 = vrot.slane %v1573, 1
        %v1575 = vadd.f32 %v1573, %v1574
        %v1576 = vadd.f32 %v1474, %v1575
        %1577 = vst [vmem:[#allocation2] sm:$0x1] %v1576
        %p1578 = scmp.eq.s32.totalorder %s23, 1
        // Predicated region
        $region37: #{tpu_custom_call.1} parent=31 // pred_check
          %p1579 = pneg %p1578
        $region38: #{tpu_custom_call.1} parent=31 // pred_check_branch
          %1581 = sbr.rel (%p1579) target = $region40
        $region39: #{tpu_custom_call.1} parent=31 // pred_region
          %v1582 = vld [vmem:[#allocation2] sm:$0x1]
          %s1583 = sld [smem:[#allocation3]]
          %v1584 = vstv %s1583
          %v1585 = vmul.f32 %v1582, %v1584
          %1586 = vst [vmem:[%s189] sm:$0x1] %v1585
        $region40: #{tpu_custom_call.1} parent=31 // pred_fallthru
          _
        %s1587 = sand.u32 %s111, 1
        %s1588 = scalar_lea.sflag [#allocation5], %s1587
        %s1589 = sand.u32 %s111, 1
        %s1590 = scalar_lea.vmem [#allocation4], %s1589
        // Predicated region
        $region41: #{tpu_custom_call.1} parent=31 // pred_check
          %p1591 = pneg %p121
        $region42: #{tpu_custom_call.1} parent=31 // pred_check_branch
          %1593 = sbr.rel (%p1591) target = $region44
        $region43: #{tpu_custom_call.1} parent=31 // pred_region
          %1595 = vsyncadd %s1588, 0
          %s1596 = scalar_lea.hbm %s3, %s22
          %s1598 = sshll.u32 %s1590, 4
          %s1599 = int_to_ptr.vmem [resolvable:$true] %s1598
          %s1600 = sshll.u32 %s1596, 4
          %s1601 = int_to_ptr.hbm [resolvable:$true] %s1600
          %1603 = dma.vmem_to_hbm [thread:$0]  %s1599, 16, %s1601, %s1588
        $region44: #{tpu_custom_call.1} parent=31 // pred_fallthru
          _
      $region32: #{tpu_custom_call.1} parent=5 // pred_fallthru
        _
      %p1604 = scmp.le.s32.totalorder 2, %s13
      // Predicated region
      $region45: #{tpu_custom_call.1} parent=5 // pred_check
        %p1605 = pneg %p1604
      $region46: #{tpu_custom_call.1} parent=5 // pred_check_branch
        %1607 = sbr.rel (%p1605) target = $region48
      $region47: #{tpu_custom_call.1} parent=5 // pred_region
        %s1608 = ssub.s32 %s13, 2
        // Predicated region
        $region49: #{tpu_custom_call.1} parent=47 // pred_check
          %p1609 = pneg %p127
        $region50: #{tpu_custom_call.1} parent=47 // pred_check_branch
          %1611 = sbr.rel (%p1609) target = $region52
        $region51: #{tpu_custom_call.1} parent=47 // pred_region
          %s1612 = sand.u32 %s112, 1
          %s1613 = scalar_lea.sflag [#allocation5], %s1612
          %s1614 = sand.u32 %s112, 1
          %s1615 = scalar_lea.vmem [#allocation4], %s1614
          %1617 = dma.done %s1613, 16
        $region52: #{tpu_custom_call.1} parent=47 // pred_fallthru
          _
      $region48: #{tpu_custom_call.1} parent=5 // pred_fallthru
        _
    $region6: #{tpu_custom_call.1} parent=1 // loop_footer
      %s17 = sadd.s32 1, %s13
    $region7: #{tpu_custom_call.1} parent=1 // loop_footer_branch
      %12 = sbr.rel target = $region3
    $region8: #{tpu_custom_call.1} parent=1 // loop_exit
      _
    %1618 = vsyncpa [#allocation5], 1
    %s1619 = scalar_lea.sflag [#allocation5], 1
    %1620 = vsyncpa %s1619, 1

</llo_original>
